<compile_context>
chip_gen: v6e
topology: v6e:2x2x1
jax: 0.10.0
libtpu: 0.0.40
codegen_flags: <defaults>
</compile_context>

<pallas_src>
import functools
import numpy as np
import jax
import jax.numpy as jnp
from jax.experimental import pallas as pl
from jax.experimental.pallas import tpu as pltpu

LANE = 128  # TPU vreg lane width; Cout tile width.


# ------------- hypercomplex kernel assembly (parameter glue, plain JAX) -------

def get_comp_mat(n_divs=4):
    """Signed component table of the Hamilton product (quaternion, n_divs=4).

    Entry (c, b): output component c accumulates sgn[c, b] * W[idx[c, b]] * x_b.
    """
    assert n_divs == 4, "only the quaternion (n_divs=4) table is implemented"
    # TODO(synk): general Cayley-Dickson composition matrix for other n_divs.
    idx = np.array([[0, 1, 2, 3],
                    [1, 0, 3, 2],
                    [2, 3, 0, 1],
                    [3, 2, 1, 0]], dtype=np.int32)
    sgn = np.array([[1, -1, -1, -1],
                    [1,  1, -1,  1],
                    [1,  1,  1, -1],
                    [1, -1,  1,  1]], dtype=np.float32)
    return idx, sgn


def fast_hypercomplex(weight, n_divs=4, comp_mat=None):
    """weight: (n_divs, O/n, I/n, KH, KW) -> full conv kernel (O, I, KH, KW)."""
    if comp_mat is None:
        comp_mat = get_comp_mat(n_divs)
    idx, sgn = comp_mat
    rows = []
    for c in range(n_divs):
        blocks = [sgn[c, b] * weight[idx[c, b]] for b in range(n_divs)]
        rows.append(jnp.concatenate(blocks, axis=1))   # in-channel blocks
    return jnp.concatenate(rows, axis=0)               # out-channel blocks


# --------------------------- Pallas conv2d kernel -----------------------------

def _conv_gemm_kernel(x_ref, w_ref, b_ref, o_ref, col_ref, *,
                      tile_h, ow, kh, kw, cin):
    """One (batch, row-tile, cout-tile) grid step.

    x_ref:   (1, Hp, Wp, Cin)   full padded NHWC image (bf16, VMEM-resident per batch)
    w_ref:   (KH*KW*Cin, CT)    bf16 GEMM weight tile (CT = 128)
    b_ref:   (1, CT)            f32 bias tile
    o_ref:   (1, tile_h, OW, CT)
    col_ref: (tile_h, OW, KH*KW*Cin) bf16 im2col scratch (persists across steps)
    """
    ir = pl.program_id(1)                                # row-tile index
    jc = pl.program_id(2)                                # cout-tile index (innermost)
    r0 = pl.multiple_of(ir * tile_h, tile_h)             # first padded input row
    tm = tile_h * ow
    kdim = kh * kw * cin

    # The im2col patch depends only on (batch, row-tile): build it once per row
    # tile and reuse it for every Cout tile (jc is the innermost grid axis).
    @pl.when(jc == 0)
    def _build_im2col():
        for dh in range(kh):
            for dw in range(kw):
                patch = x_ref[0, pl.ds(r0 + dh, tile_h), dw:dw + ow, :]
                k0 = (dh * kw + dw) * cin
                col_ref[:, :, k0:k0 + cin] = patch.astype(col_ref.dtype)

    # Single MXU GEMM over the full K = KH*KW*Cin contraction, f32 accumulation.
    col = col_ref[...].reshape(tm, kdim)                            # (M, K) bf16
    acc = jnp.dot(col, w_ref[...], preferred_element_type=jnp.float32)
    acc = acc + b_ref[...]                                          # (1, CT) bcast
    # Lane-dense store: block last dim is the 128-wide Cout tile.
    o_ref[0] = acc.reshape(tile_h, ow, LANE).astype(o_ref.dtype)


def _pick_tile_h(oh, ow, max_m=512):
    """Largest divisor of `oh` whose GEMM M dim (tile_h*ow) stays <= max_m,
    preferring >= 2 row tiles so the grid has pipeline depth."""
    divs = [t for t in range(1, oh + 1) if oh % t == 0]
    cand = [t for t in divs if t * ow <= max_m] or [1]
    best = max(cand)
    if best == oh and oh > 1:
        proper = [t for t in cand if t < oh]
        if proper:
            best = max(proper)
    return best


def hyperconv2d(x_nchw, weight, bias, *, n_divs=4, padding=1,
                stride=1, dilation=1, groups=1):
    """HyperConv.forward for operation='convolution2d' (module defaults only)."""
    assert stride == 1 and dilation == 1 and groups == 1, \
        "only stride=1, dilation=1, groups=1 are implemented"
    # TODO(synk): general stride/dilation/groups and conv1d/3d not implemented.
    kernel_oihw = fast_hypercomplex(weight, n_divs)               # (O, I, KH, KW)
    o, i, kh, kw = kernel_oihw.shape
    n, cin, h, w = x_nchw.shape
    assert cin == i, "input channel mismatch"
    out_dtype = x_nchw.dtype

    cout_p = ((o + LANE - 1) // LANE) * LANE                       # 128-padded Cout
    kdim = kh * kw * cin                                           # GEMM K

    # Weight -> (KH*KW*Cin, Cout_p) bf16; row index = (dh*KW + dw)*Cin + ci,
    # matching the im2col column order built in the kernel.
    w_mat = jnp.transpose(kernel_oihw, (2, 3, 1, 0)).reshape(kdim, o)
    w_mat = jnp.pad(w_mat, ((0, 0), (0, cout_p - o))).astype(jnp.bfloat16)
    b_vec = jnp.pad(bias, (0, cout_p - o)).reshape(1, cout_p).astype(jnp.float32)

    # NCHW -> padded NHWC, cast to bf16 (single fused XLA copy; halves the
    # per-batch image DMA and removes the per-patch casts inside the kernel).
    # TODO(synk): for very large spatial inputs, fold padding/halo handling into
    # the kernel (manual halo-strip DMA) to avoid this HBM round trip and the
    # full-image VMEM residency; at these sizes it is negligible.
    x = jnp.transpose(x_nchw, (0, 2, 3, 1)).astype(jnp.bfloat16)
    x = jnp.pad(x, ((0, 0), (padding, padding), (padding, padding), (0, 0)))
    hp, wp = h + 2 * padding, w + 2 * padding
    oh, ow = hp - kh + 1, wp - kw + 1                              # stride 1

    tile_h = _pick_tile_h(oh, ow)
    n_row = oh // tile_h
    n_co = cout_p // LANE

    kern = functools.partial(_conv_gemm_kernel, tile_h=tile_h, ow=ow,
                             kh=kh, kw=kw, cin=cin)
    out = pl.pallas_call(
        kern,
        out_shape=jax.ShapeDtypeStruct((n, oh, ow, cout_p), out_dtype),
        grid_spec=pltpu.PrefetchScalarGridSpec(
            num_scalar_prefetch=0,
            grid=(n, n_row, n_co),
            in_specs=[
                # Full padded image; block index depends only on batch -> kept
                # resident in VMEM across all inner row/cout steps.
                pl.BlockSpec((1, hp, wp, cin), lambda b, ir, jc: (b, 0, 0, 0)),
                # 128-wide Cout weight tile (bf16).
                pl.BlockSpec((kdim, LANE), lambda b, ir, jc: (0, jc)),
                pl.BlockSpec((1, LANE), lambda b, ir, jc: (0, jc)),
            ],
            out_specs=pl.BlockSpec((1, tile_h, ow, LANE),
                                   lambda b, ir, jc: (b, ir, 0, jc)),
            scratch_shapes=[pltpu.VMEM((tile_h, ow, kdim), jnp.bfloat16)],
        ),
        compiler_params=pltpu.CompilerParams(
            # Cout axis is innermost and carries the im2col-scratch reuse,
            # so it must be "arbitrary"; batch/row stay megacore-shardable.
            dimension_semantics=("parallel", "parallel", "arbitrary"),
            # Fits comfortably on v5e/v6e (128 MiB) and v7x (64 MiB physical).
            vmem_limit_bytes=32 * 1024 * 1024,
        ),
    )(x, w_mat, b_vec)

    out = out[..., :o]                                   # drop Cout padding
    return jnp.transpose(out, (0, 3, 1, 2))              # NHWC -> NCHW


# ----------------------------------- main -------------------------------------

if __name__ == "__main__":
    key = jax.random.PRNGKey(0)
    n_divs = 4
    in_channels, out_channels, ksize = 8, 8, 3
    batch, H, W = 2, 16, 16

    k_w, k_b, k_x = jax.random.split(key, 3)
    # Deterministic synthetic init (the module's chi/phase init is a randomized
    # host-side scheme; shapes match HyperConv.w_shape = (n_divs, O/n, I/n, KH, KW)).
    weight = 0.1 * jax.random.normal(
        k_w, (n_divs, out_channels // n_divs, in_channels // n_divs, ksize, ksize),
        dtype=jnp.float32)
    bias = 0.05 * jax.random.normal(k_b, (out_channels,), dtype=jnp.float32)
    x = jax.random.normal(k_x, (batch, in_channels, H, W), dtype=jnp.float32)

    out = hyperconv2d(x, weight, bias, n_divs=n_divs, padding=1)
    out = jax.block_until_ready(out)

    # Reference: plain XLA conv with the same assembled hypercomplex kernel.
    kernel_oihw = fast_hypercomplex(weight, n_divs)
    ref = jax.lax.conv_general_dilated(
        x, kernel_oihw, window_strides=(1, 1), padding=((1, 1), (1, 1)),
        dimension_numbers=("NCHW", "OIHW", "NCHW"),
        precision=jax.lax.Precision.HIGHEST) + bias.reshape(1, -1, 1, 1)
    np.testing.assert_allclose(np.asarray(out), np.asarray(ref),
                               rtol=2e-2, atol=2e-2)
    print("KERNEL_OK")
</pallas_src>

<mosaic_0001>
module attributes {stable_mosaic.version = 11 : i64} {
  func.func @_conv_gemm_kernel(%arg0: i32, %arg1: i32, %arg2: i32, %arg3: memref<1x18x18x8xbf16, #tpu.memory_space<vmem>>, %arg4: memref<72x128xbf16, #tpu.memory_space<vmem>>, %arg5: memref<1x128xf32, #tpu.memory_space<vmem>>, %arg6: memref<1x8x16x128xf32, #tpu.memory_space<vmem>>, %arg7: memref<8x16x72xbf16, #tpu.memory_space<vmem>>) attributes {dimension_semantics = [#tpu.dimension_semantics<parallel>, #tpu.dimension_semantics<parallel>, #tpu.dimension_semantics<arbitrary>], iteration_bounds = array<i64: 2, 2, 1>, scalar_prefetch = 0 : i64, scratch_operands = 1 : i64, tpu.core_type = #tpu.core_type<tc>, window_params = [{transform_indices = @transform_0, window_bounds = array<i64: 1, 18, 18, 8>}, {transform_indices = @transform_1, window_bounds = array<i64: 72, 128>}, {transform_indices = @transform_2, window_bounds = array<i64: 1, 128>}, {transform_indices = @transform_3, window_bounds = array<i64: 1, 8, 16, 128>}]} {
    %c8_i32 = arith.constant 8 : i32
    %0 = arith.muli %arg1, %c8_i32 : i32
    %1 = tpu.assume_multiple %0, 8 : i32
    %c0_i32 = arith.constant 0 : i32
    %2 = arith.cmpi eq, %arg2, %c0_i32 : i32
    %3 = arith.extui %2 : i1 to i32
    %c0_i32_0 = arith.constant 0 : i32
    %4 = arith.cmpi ne, %3, %c0_i32_0 : i32
    scf.if %4 {
      %c0_i32_11 = arith.constant 0 : i32
      %16 = arith.addi %1, %c0_i32_11 : i32
      %c0_12 = arith.constant 0 : index
      %17 = arith.index_cast %16 : i32 to index
      %c0_13 = arith.constant 0 : index
      %c0_14 = arith.constant 0 : index
      %18 = vector.load %arg3[%c0_12, %17, %c0_13, %c0_14] : memref<1x18x18x8xbf16, #tpu.memory_space<vmem>>, vector<1x8x16x8xbf16>
      %19 = vector.shape_cast %18 : vector<1x8x16x8xbf16> to vector<8x16x8xbf16>
      %c0_15 = arith.constant 0 : index
      %c0_16 = arith.constant 0 : index
      %c0_17 = arith.constant 0 : index
      %20 = vector.load %arg7[%c0_15, %c0_16, %c0_17] : memref<8x16x72xbf16, #tpu.memory_space<vmem>>, vector<8x16x8xbf16>
      tpu.vector_store %arg7[%c0_15, %c0_16, %c0_17], %19 {strides = array<i32>} : memref<8x16x72xbf16, #tpu.memory_space<vmem>>, vector<8x16x8xbf16>,
      %c0_i32_18 = arith.constant 0 : i32
      %21 = arith.addi %1, %c0_i32_18 : i32
      %c0_19 = arith.constant 0 : index
      %22 = arith.index_cast %21 : i32 to index
      %c1 = arith.constant 1 : index
      %c0_20 = arith.constant 0 : index
      %23 = vector.load %arg3[%c0_19, %22, %c1, %c0_20] : memref<1x18x18x8xbf16, #tpu.memory_space<vmem>>, vector<1x8x16x8xbf16>
      %24 = vector.shape_cast %23 : vector<1x8x16x8xbf16> to vector<8x16x8xbf16>
      %c0_21 = arith.constant 0 : index
      %c0_22 = arith.constant 0 : index
      %c8 = arith.constant 8 : index
      %25 = vector.load %arg7[%c0_21, %c0_22, %c8] : memref<8x16x72xbf16, #tpu.memory_space<vmem>>, vector<8x16x8xbf16>
      tpu.vector_store %arg7[%c0_21, %c0_22, %c8], %24 {strides = array<i32>} : memref<8x16x72xbf16, #tpu.memory_space<vmem>>, vector<8x16x8xbf16>,
      %c0_i32_23 = arith.constant 0 : i32
      %26 = arith.addi %1, %c0_i32_23 : i32
      %c0_24 = arith.constant 0 : index
      %27 = arith.index_cast %26 : i32 to index
      %c2 = arith.constant 2 : index
      %c0_25 = arith.constant 0 : index
      %28 = vector.load %arg3[%c0_24, %27, %c2, %c0_25] : memref<1x18x18x8xbf16, #tpu.memory_space<vmem>>, vector<1x8x16x8xbf16>
      %29 = vector.shape_cast %28 : vector<1x8x16x8xbf16> to vector<8x16x8xbf16>
      %c0_26 = arith.constant 0 : index
      %c0_27 = arith.constant 0 : index
      %c16 = arith.constant 16 : index
      %30 = vector.load %arg7[%c0_26, %c0_27, %c16] : memref<8x16x72xbf16, #tpu.memory_space<vmem>>, vector<8x16x8xbf16>
      tpu.vector_store %arg7[%c0_26, %c0_27, %c16], %29 {strides = array<i32>} : memref<8x16x72xbf16, #tpu.memory_space<vmem>>, vector<8x16x8xbf16>,
      %c1_i32 = arith.constant 1 : i32
      %31 = arith.addi %1, %c1_i32 : i32
      %c0_28 = arith.constant 0 : index
      %32 = arith.index_cast %31 : i32 to index
      %c0_29 = arith.constant 0 : index
      %c0_30 = arith.constant 0 : index
      %33 = vector.load %arg3[%c0_28, %32, %c0_29, %c0_30] : memref<1x18x18x8xbf16, #tpu.memory_space<vmem>>, vector<1x8x16x8xbf16>
      %34 = vector.shape_cast %33 : vector<1x8x16x8xbf16> to vector<8x16x8xbf16>
      %c0_31 = arith.constant 0 : index
      %c0_32 = arith.constant 0 : index
      %c24 = arith.constant 24 : index
      %35 = vector.load %arg7[%c0_31, %c0_32, %c24] : memref<8x16x72xbf16, #tpu.memory_space<vmem>>, vector<8x16x8xbf16>
      tpu.vector_store %arg7[%c0_31, %c0_32, %c24], %34 {strides = array<i32>} : memref<8x16x72xbf16, #tpu.memory_space<vmem>>, vector<8x16x8xbf16>,
      %c1_i32_33 = arith.constant 1 : i32
      %36 = arith.addi %1, %c1_i32_33 : i32
      %c0_34 = arith.constant 0 : index
      %37 = arith.index_cast %36 : i32 to index
      %c1_35 = arith.constant 1 : index
      %c0_36 = arith.constant 0 : index
      %38 = vector.load %arg3[%c0_34, %37, %c1_35, %c0_36] : memref<1x18x18x8xbf16, #tpu.memory_space<vmem>>, vector<1x8x16x8xbf16>
      %39 = vector.shape_cast %38 : vector<1x8x16x8xbf16> to vector<8x16x8xbf16>
      %c0_37 = arith.constant 0 : index
      %c0_38 = arith.constant 0 : index
      %c32 = arith.constant 32 : index
      %40 = vector.load %arg7[%c0_37, %c0_38, %c32] : memref<8x16x72xbf16, #tpu.memory_space<vmem>>, vector<8x16x8xbf16>
      tpu.vector_store %arg7[%c0_37, %c0_38, %c32], %39 {strides = array<i32>} : memref<8x16x72xbf16, #tpu.memory_space<vmem>>, vector<8x16x8xbf16>,
      %c1_i32_39 = arith.constant 1 : i32
      %41 = arith.addi %1, %c1_i32_39 : i32
      %c0_40 = arith.constant 0 : index
      %42 = arith.index_cast %41 : i32 to index
      %c2_41 = arith.constant 2 : index
      %c0_42 = arith.constant 0 : index
      %43 = vector.load %arg3[%c0_40, %42, %c2_41, %c0_42] : memref<1x18x18x8xbf16, #tpu.memory_space<vmem>>, vector<1x8x16x8xbf16>
      %44 = vector.shape_cast %43 : vector<1x8x16x8xbf16> to vector<8x16x8xbf16>
      %c0_43 = arith.constant 0 : index
      %c0_44 = arith.constant 0 : index
      %c40 = arith.constant 40 : index
      %45 = vector.load %arg7[%c0_43, %c0_44, %c40] : memref<8x16x72xbf16, #tpu.memory_space<vmem>>, vector<8x16x8xbf16>
      tpu.vector_store %arg7[%c0_43, %c0_44, %c40], %44 {strides = array<i32>} : memref<8x16x72xbf16, #tpu.memory_space<vmem>>, vector<8x16x8xbf16>,
      %c2_i32 = arith.constant 2 : i32
      %46 = arith.addi %1, %c2_i32 : i32
      %c0_45 = arith.constant 0 : index
      %47 = arith.index_cast %46 : i32 to index
      %c0_46 = arith.constant 0 : index
      %c0_47 = arith.constant 0 : index
      %48 = vector.load %arg3[%c0_45, %47, %c0_46, %c0_47] : memref<1x18x18x8xbf16, #tpu.memory_space<vmem>>, vector<1x8x16x8xbf16>
      %49 = vector.shape_cast %48 : vector<1x8x16x8xbf16> to vector<8x16x8xbf16>
      %c0_48 = arith.constant 0 : index
      %c0_49 = arith.constant 0 : index
      %c48 = arith.constant 48 : index
      %50 = vector.load %arg7[%c0_48, %c0_49, %c48] : memref<8x16x72xbf16, #tpu.memory_space<vmem>>, vector<8x16x8xbf16>
      tpu.vector_store %arg7[%c0_48, %c0_49, %c48], %49 {strides = array<i32>} : memref<8x16x72xbf16, #tpu.memory_space<vmem>>, vector<8x16x8xbf16>,
      %c2_i32_50 = arith.constant 2 : i32
      %51 = arith.addi %1, %c2_i32_50 : i32
      %c0_51 = arith.constant 0 : index
      %52 = arith.index_cast %51 : i32 to index
      %c1_52 = arith.constant 1 : index
      %c0_53 = arith.constant 0 : index
      %53 = vector.load %arg3[%c0_51, %52, %c1_52, %c0_53] : memref<1x18x18x8xbf16, #tpu.memory_space<vmem>>, vector<1x8x16x8xbf16>
      %54 = vector.shape_cast %53 : vector<1x8x16x8xbf16> to vector<8x16x8xbf16>
      %c0_54 = arith.constant 0 : index
      %c0_55 = arith.constant 0 : index
      %c56 = arith.constant 56 : index
      %55 = vector.load %arg7[%c0_54, %c0_55, %c56] : memref<8x16x72xbf16, #tpu.memory_space<vmem>>, vector<8x16x8xbf16>
      tpu.vector_store %arg7[%c0_54, %c0_55, %c56], %54 {strides = array<i32>} : memref<8x16x72xbf16, #tpu.memory_space<vmem>>, vector<8x16x8xbf16>,
      %c2_i32_56 = arith.constant 2 : i32
      %56 = arith.addi %1, %c2_i32_56 : i32
      %c0_57 = arith.constant 0 : index
      %57 = arith.index_cast %56 : i32 to index
      %c2_58 = arith.constant 2 : index
      %c0_59 = arith.constant 0 : index
      %58 = vector.load %arg3[%c0_57, %57, %c2_58, %c0_59] : memref<1x18x18x8xbf16, #tpu.memory_space<vmem>>, vector<1x8x16x8xbf16>
      %59 = vector.shape_cast %58 : vector<1x8x16x8xbf16> to vector<8x16x8xbf16>
      %c0_60 = arith.constant 0 : index
      %c0_61 = arith.constant 0 : index
      %c64 = arith.constant 64 : index
      %60 = vector.load %arg7[%c0_60, %c0_61, %c64] : memref<8x16x72xbf16, #tpu.memory_space<vmem>>, vector<8x16x8xbf16>
      tpu.vector_store %arg7[%c0_60, %c0_61, %c64], %59 {strides = array<i32>} : memref<8x16x72xbf16, #tpu.memory_space<vmem>>, vector<8x16x8xbf16>,
    } else {
    }
    %c0 = arith.constant 0 : index
    %c0_1 = arith.constant 0 : index
    %c0_2 = arith.constant 0 : index
    %5 = vector.load %arg7[%c0, %c0_1, %c0_2] : memref<8x16x72xbf16, #tpu.memory_space<vmem>>, vector<8x16x72xbf16>
    %6 = vector.shape_cast %5 : vector<8x16x72xbf16> to vector<128x72xbf16>
    %c0_3 = arith.constant 0 : index
    %c0_4 = arith.constant 0 : index
    %7 = vector.load %arg4[%c0_3, %c0_4] : memref<72x128xbf16, #tpu.memory_space<vmem>>, vector<72x128xbf16>
    %cst = arith.constant dense<0.000000e+00> : vector<128x128xf32>
    %8 = tpu.matmul %6, %7, %cst {dimension_numbers = #tpu.dot_dimension_numbers<[1], [0], [0], [1], [0, 0, 1, 1], [], []>} : vector<128x72xbf16>, vector<72x128xbf16>, vector<128x128xf32> -> vector<128x128xf32>
    %c0_5 = arith.constant 0 : index
    %c0_6 = arith.constant 0 : index
    %9 = vector.load %arg5[%c0_5, %c0_6] : memref<1x128xf32, #tpu.memory_space<vmem>>, vector<1x128xf32>
    %10 = vector.broadcast %9 : vector<1x128xf32> to vector<128x128xf32>
    %11 = arith.addf %8, %10 : vector<128x128xf32>
    %12 = vector.shape_cast %11 : vector<128x128xf32> to vector<8x16x128xf32>
    %c0_7 = arith.constant 0 : index
    %c0_8 = arith.constant 0 : index
    %c0_9 = arith.constant 0 : index
    %c0_10 = arith.constant 0 : index
    %13 = vector.load %arg6[%c0_7, %c0_8, %c0_9, %c0_10] : memref<1x8x16x128xf32, #tpu.memory_space<vmem>>, vector<1x8x16x128xf32>
    %14 = vector.shape_cast %13 : vector<1x8x16x128xf32> to vector<8x16x128xf32>
    %15 = vector.shape_cast %12 : vector<8x16x128xf32> to vector<1x8x16x128xf32>
    tpu.vector_store %arg6[%c0_7, %c0_8, %c0_9, %c0_10], %15 {strides = array<i32>} : memref<1x8x16x128xf32, #tpu.memory_space<vmem>>, vector<1x8x16x128xf32>,
    return
  }
  func.func @transform_0(%arg0: i32, %arg1: i32, %arg2: i32) -> (i32, i32, i32, i32) {
    %c0_i32 = arith.constant 0 : i32
    %c0_i32_0 = arith.constant 0 : i32
    %c0_i32_1 = arith.constant 0 : i32
    %c0_i32_2 = arith.constant 0 : i32
    return %arg0, %c0_i32, %c0_i32_0, %c0_i32_1 : i32, i32, i32, i32
  }
  func.func @transform_1(%arg0: i32, %arg1: i32, %arg2: i32) -> (i32, i32) {
    %c0_i32 = arith.constant 0 : i32
    %c0_i32_0 = arith.constant 0 : i32
    return %c0_i32, %arg2 : i32, i32
  }
  func.func @transform_2(%arg0: i32, %arg1: i32, %arg2: i32) -> (i32, i32) {
    %c0_i32 = arith.constant 0 : i32
    %c0_i32_0 = arith.constant 0 : i32
    return %c0_i32, %arg2 : i32, i32
  }
  func.func @transform_3(%arg0: i32, %arg1: i32, %arg2: i32) -> (i32, i32, i32, i32) {
    %c0_i32 = arith.constant 0 : i32
    %c0_i32_0 = arith.constant 0 : i32
    return %arg0, %arg1, %c0_i32, %arg2 : i32, i32, i32, i32
  }
}

</mosaic_0001>

<llo_original>
// kernel: tpu_custom_call.1
$region0: #{tpu_custom_call.1}
  #allocation0 [shape = 'u32[]', space=smem, size = 0x4, offset = 0x4, fixed_abs, tag = 'smem constant byte address 0x4 - core index']
  #allocation1 [shape = 'u32[144,128]{1,0:T(1,128)}', space=vmem, size = 0x12000, scoped, tag = 'internal scratch']
  #allocation2 [shape = 'bf16[8,16,72]{2,1,0:T(8,128)(2,1)}', space=vmem, size = 0x8000, scoped, tag = 'scratch operand']
  %s0 = inlined_call_operand.vmem [shape: bf16[2,18,18,8], index: 0, kind: input, shape index: {}]
  %s1 = inlined_call_operand.vmem [shape: bf16[72,128], index: 1, kind: input, shape index: {}]
  %s2 = inlined_call_operand.vmem [shape: f32[1,128], index: 2, kind: input, shape index: {}]
  %s3 = inlined_call_operand.hbm [shape: f32[2,16,16,128], index: 3, kind: output, shape index: {}]
  %s4 = sld [smem:[#allocation0]]
  $region49: #{tpu_custom_call.1} parent=0
    _
  %s6 = ssub.s32 1, %s4
  %s7 = scalar_select 0, %s6, %s4
  $region1: #{tpu_custom_call.1} parent=0
    #allocation3 [shape = 'u8[131072]{0}', space=vmem, size = 0x20000, scoped, tag = 'output window, operand 0']
    #allocation4 [shape = 's32[2]{0}', space=sflag, size = 0x8, scoped, tag = 'scoped memory for tpu_custom_call.1']
    %8 = vsyncpa [#allocation4], 0
    %s9 = scalar_lea.sflag [#allocation4], 1
    %10 = vsyncpa %s9, 0
    loop: start=0, step=1, limit=6
    $region2: #{tpu_custom_call.1} parent=1 // loop_pre_header
      _
    $region3: #{tpu_custom_call.1} parent=1 // loop_header
      %s12 = sphi 0, %s16
      %p13 = scmp.ge.s32.totalorder %s12, 6
      %s19 = sphi 0, %s38
      %s20 = sphi 0, %s34
      %s21 = sphi 0, %s30
      %s22 = sphi 0, %s19
      %s23 = sphi 0, %s20
      %s24 = sphi 0, %s21
      %s25 = sphi 0, %s22
      %s26 = sphi 0, %s23
      %s27 = sphi 0, %s24
      %s41 = sphi 0, %s43
      %s44 = sphi 0, %s41
      %s45 = sphi 0, %s44
      %s61 = sphi 0, %s45
      %s67 = sphi 0, %s69
      %s70 = sphi 0, %s67
      %s71 = sphi 0, %s70
      %s87 = sphi 0, %s71
      %s93 = sphi 0, %s95
      %s96 = sphi 0, %s93
      %s97 = sphi 0, %s96
      %s113 = sphi 0, %s97
      %s123 = sphi 0, %s125
      %s126 = sphi 0, %s123
      %s127 = sphi 0, %s126
      %s143 = sphi 0, %s127
    $region4: #{tpu_custom_call.1} parent=1 // loop_header_branch
      %15 = sbr.rel (%p13) target = $region8
    $region5: #{tpu_custom_call.1} parent=1 // loop_body
      %s17 = ssub.s32 %s12, 1
      %s18 = ssub.s32 %s12, 2
      %s28 = sadd.s32 1, %s21
      %p29 = scmp.ge.s32.totalorder %s28, 1
      %s30 = scalar_select %p29, 0, %s28
      %s31 = sadd.s32 1, %s20
      %s32 = scalar_select %p29, %s31, %s20
      %p33 = scmp.ge.s32.totalorder %s32, 2
      %s34 = scalar_select %p33, 0, %s32
      %s35 = sadd.s32 1, %s19
      %s36 = scalar_select %p33, %s35, %s19
      %p37 = scmp.ge.s32.totalorder %s36, 2
      %s38 = scalar_select %p37, 0, %s36
      %s39 = ssub.s32 %s19, %s38
      %p40 = scmp.eq.s32.totalorder %s39, 0
      %s42 = sadd.s32 %s41, 1
      %s43 = scalar_select %p40, %s41, %s42
      %p46 = pneg %p40
      %p47 = scmp.eq.s32.totalorder %s12, 3
      %p48 = por %p46, %p47
      %p49 = scmp.ne.s32.totalorder %s41, %s44
      %p50 = scmp.eq.s32.totalorder %s12, 0
      %p51 = por %p49, %p50
      %p52 = scmp.ne.s32.totalorder %s41, %s44
      %p53 = scmp.eq.s32.totalorder %s17, 3
      %p54 = por %p52, %p53
      %p55 = scmp.ne.s32.totalorder %s44, %s45
      %p56 = scmp.eq.s32.totalorder %s17, 0
      %p57 = por %p55, %p56
      %p58 = scmp.ne.s32.totalorder %s44, %s45
      %p59 = scmp.eq.s32.totalorder %s18, 3
      %p60 = por %p58, %p59
      %p62 = scmp.ne.s32.totalorder %s45, %s61
      %p63 = scmp.eq.s32.totalorder %s18, 0
      %p64 = por %p62, %p63
      %s65 = ssub.s32 %s21, %s30
      %p66 = scmp.eq.s32.totalorder %s65, 0
      %s68 = sadd.s32 %s67, 1
      %s69 = scalar_select %p66, %s67, %s68
      %p72 = pneg %p66
      %p73 = scmp.eq.s32.totalorder %s12, 3
      %p74 = por %p72, %p73
      %p75 = scmp.ne.s32.totalorder %s67, %s70
      %p76 = scmp.eq.s32.totalorder %s12, 0
      %p77 = por %p75, %p76
      %p78 = scmp.ne.s32.totalorder %s67, %s70
      %p79 = scmp.eq.s32.totalorder %s17, 3
      %p80 = por %p78, %p79
      %p81 = scmp.ne.s32.totalorder %s70, %s71
      %p82 = scmp.eq.s32.totalorder %s17, 0
      %p83 = por %p81, %p82
      %p84 = scmp.ne.s32.totalorder %s70, %s71
      %p85 = scmp.eq.s32.totalorder %s18, 3
      %p86 = por %p84, %p85
      %p88 = scmp.ne.s32.totalorder %s71, %s87
      %p89 = scmp.eq.s32.totalorder %s18, 0
      %p90 = por %p88, %p89
      %s91 = ssub.s32 %s21, %s30
      %p92 = scmp.eq.s32.totalorder %s91, 0
      %s94 = sadd.s32 %s93, 1
      %s95 = scalar_select %p92, %s93, %s94
      %p98 = pneg %p92
      %p99 = scmp.eq.s32.totalorder %s12, 3
      %p100 = por %p98, %p99
      %p101 = scmp.ne.s32.totalorder %s93, %s96
      %p102 = scmp.eq.s32.totalorder %s12, 0
      %p103 = por %p101, %p102
      %p104 = scmp.ne.s32.totalorder %s93, %s96
      %p105 = scmp.eq.s32.totalorder %s17, 3
      %p106 = por %p104, %p105
      %p107 = scmp.ne.s32.totalorder %s96, %s97
      %p108 = scmp.eq.s32.totalorder %s17, 0
      %p109 = por %p107, %p108
      %p110 = scmp.ne.s32.totalorder %s96, %s97
      %p111 = scmp.eq.s32.totalorder %s18, 3
      %p112 = por %p110, %p111
      %p114 = scmp.ne.s32.totalorder %s97, %s113
      %p115 = scmp.eq.s32.totalorder %s18, 0
      %p116 = por %p114, %p115
      %s117 = ssub.s32 %s19, %s38
      %s118 = ssub.s32 %s20, %s34
      %s119 = sor.u32 %s117, %s118
      %s120 = ssub.s32 %s21, %s30
      %s121 = sor.u32 %s119, %s120
      %p122 = scmp.eq.s32.totalorder %s121, 0
      %s124 = sadd.s32 %s123, 1
      %s125 = scalar_select %p122, %s123, %s124
      %p128 = pneg %p122
      %p129 = scmp.eq.s32.totalorder %s12, 3
      %p130 = por %p128, %p129
      %p131 = scmp.ne.s32.totalorder %s123, %s126
      %p132 = scmp.eq.s32.totalorder %s12, 0
      %p133 = por %p131, %p132
      %p134 = scmp.ne.s32.totalorder %s123, %s126
      %p135 = scmp.eq.s32.totalorder %s17, 3
      %p136 = por %p134, %p135
      %p137 = scmp.ne.s32.totalorder %s126, %s127
      %p138 = scmp.eq.s32.totalorder %s17, 0
      %p139 = por %p137, %p138
      %p140 = scmp.ne.s32.totalorder %s126, %s127
      %p141 = scmp.eq.s32.totalorder %s18, 3
      %p142 = por %p140, %p141
      %p144 = scmp.ne.s32.totalorder %s127, %s143
      %p145 = scmp.eq.s32.totalorder %s18, 0
      %p146 = por %p144, %p145
      %p147 = scmp.le.s32.totalorder 1, %s12
      %p148 = scmp.lt.s32.totalorder %s12, 5
      %p149 = pnand %p147, %p148
      %p150 = pneg %p149
      // Predicated region
      $region9: #{tpu_custom_call.1} parent=5 // pred_check
        _
      $region10: #{tpu_custom_call.1} parent=5 // pred_check_branch
        %152 = sbr.rel (%p149) target = $region12
      $region11: #{tpu_custom_call.1} parent=5 // pred_region
        %s153 = ssub.s32 %s12, 1
        // Predicated region
        $region13: #{tpu_custom_call.1} parent=11 // pred_check
          %p154 = pneg %p83
        $region14: #{tpu_custom_call.1} parent=11 // pred_check_branch
          %156 = sbr.rel (%p154) target = $region16
        $region15: #{tpu_custom_call.1} parent=11 // pred_region
          %p157 = scmp.lt.s32.totalorder %s24, 0
          %s158 = scalar_select %p157, %s24, 0
          %s159 = smul.addr %s158, 4
          %s160 = scalar_lea.vmem %s1, %s159
        $region16: #{tpu_custom_call.1} parent=11 // pred_fallthru
          _
        // Predicated region
        $region17: #{tpu_custom_call.1} parent=11 // pred_check
          %p161 = pneg %p109
        $region18: #{tpu_custom_call.1} parent=11 // pred_check_branch
          %163 = sbr.rel (%p161) target = $region20
        $region19: #{tpu_custom_call.1} parent=11 // pred_region
          %p164 = scmp.lt.s32.totalorder %s24, 0
          %s165 = scalar_select %p164, %s24, 0
          %s166 = scalar_lea.vmem %s2, %s165
        $region20: #{tpu_custom_call.1} parent=11 // pred_fallthru
          _
      $region12: #{tpu_custom_call.1} parent=5 // pred_fallthru
        _
      %p167 = scmp.lt.s32.totalorder %s12, 4
      // Predicated region
      $region21: #{tpu_custom_call.1} parent=5 // pred_check
        %p168 = pneg %p167
      $region22: #{tpu_custom_call.1} parent=5 // pred_check_branch
        %170 = sbr.rel (%p168) target = $region24
      $region23: #{tpu_custom_call.1} parent=5 // pred_region
        // Predicated region
        $region25: #{tpu_custom_call.1} parent=23 // pred_check
          %p171 = pneg %p51
        $region26: #{tpu_custom_call.1} parent=23 // pred_check_branch
          %173 = sbr.rel (%p171) target = $region28
        $region27: #{tpu_custom_call.1} parent=23 // pred_region
          %p174 = scmp.lt.s32.totalorder %s19, 1
          %s175 = scalar_select %p174, %s19, 1
          %s176 = smul.addr %s175, 54
          %s177 = smul.addr %s176, 4
          %s178 = scalar_lea.vmem %s0, %s177
        $region28: #{tpu_custom_call.1} parent=23 // pred_fallthru
          _
      $region24: #{tpu_custom_call.1} parent=5 // pred_fallthru
        _
      %p179 = scmp.le.s32.totalorder 1, %s12
      %p180 = scmp.lt.s32.totalorder %s12, 5
      %p181 = pnand %p179, %p180
      %p182 = pneg %p181
      // Predicated region
      $region29: #{tpu_custom_call.1} parent=5 // pred_check
        _
      $region30: #{tpu_custom_call.1} parent=5 // pred_check_branch
        %184 = sbr.rel (%p181) target = $region32
      $region31: #{tpu_custom_call.1} parent=5 // pred_region
        %s185 = ssub.s32 %s12, 1
        %p186 = scmp.lt.s32.totalorder %s22, 1
        %s187 = scalar_select %p186, %s22, 1
        %s188 = smul.addr %s187, 54
        %s189 = smul.addr %s188, 4
        %s190 = scalar_lea.vmem %s0, %s189
        %p191 = pneg %p57
        %p192 = pneg %p54
        %p193 = scmp.lt.s32.totalorder %s24, 0
        %s194 = scalar_select %p193, %s24, 0
        %s195 = smul.addr %s194, 4
        %s196 = scalar_lea.vmem %s1, %s195
        %p197 = pneg %p83
        %p198 = pneg %p80
        %p199 = scmp.lt.s32.totalorder %s24, 0
        %s200 = scalar_select %p199, %s24, 0
        %s201 = scalar_lea.vmem %s2, %s200
        %p202 = pneg %p109
        %p203 = pneg %p106
        %p204 = pneg %p139
        %p205 = pneg %p136
        %s206 = sand.u32 %s126, 1
        %s207 = scalar_lea.sflag [#allocation4], %s206
        %s208 = sand.u32 %s126, 1
        %s209 = smul.addr %s208, 128
        %s210 = scalar_lea.vmem [#allocation3], %s209
        %p211 = scmp.lt.s32.totalorder %s22, 1
        %s212 = scalar_select %p211, %s22, 1
        %s213 = smul.addr %s212, 54
        %s214 = smul.addr %s213, 4
        %s215 = scalar_lea.vmem %s0, %s214
        %p216 = scmp.lt.s32.totalorder %s24, 0
        %s217 = scalar_select %p216, %s24, 0
        %s218 = smul.addr %s217, 4
        %s219 = scalar_lea.vmem %s1, %s218
        %p220 = scmp.lt.s32.totalorder %s24, 0
        %s221 = scalar_select %p220, %s24, 0
        %s222 = scalar_lea.vmem %s2, %s221
        %s223 = smul.u32 8, %s23
        %s225 = smul.u32 %s23, 8
        %p226 = scmp.eq.s32.totalorder %s24, 0
        // Predicated region
        $region33: #{tpu_custom_call.1} parent=31 // pred_check
          %p227 = pneg %p226
        $region34: #{tpu_custom_call.1} parent=31 // pred_check_branch
          %229 = sbr.rel (%p227) target = $region36
        $region35: #{tpu_custom_call.1} parent=31 // pred_region
          %s230 = smul.u32 %s225, 3
          %s231 = smul.addr %s230, 4
          %s232 = scalar_lea.vmem %s215, %s231
          %v233 = vld [vmem:[%s232] sm:$0xf]
          %v234 = vld [vmem:[%s232 + $0x4] sm:$0xf]
          %v235 = vld [vmem:[%s232 + $0xc] sm:$0xf]
          %v236 = vld [vmem:[%s232 + $0x10] sm:$0xf]
          %v237 = vld [vmem:[%s232 + $0x18] sm:$0xf]
          %v238 = vld [vmem:[%s232 + $0x1c] sm:$0xf]
          %v239 = vld [vmem:[%s232 + $0x24] sm:$0xf]
          %v240 = vld [vmem:[%s232 + $0x28] sm:$0xf]
          %v241 = vld [vmem:[%s232 + $0x30] sm:$0xf]
          %v242 = vld [vmem:[%s232 + $0x34] sm:$0xf]
          %v243 = vld [vmem:[%s232 + $0x3c] sm:$0xf]
          %v244 = vld [vmem:[%s232 + $0x40] sm:$0xf]
          %v245 = vld [vmem:[%s232 + $0x48] sm:$0xf]
          %v246 = vld [vmem:[%s232 + $0x4c] sm:$0xf]
          %v247 = vld [vmem:[%s232 + $0x54] sm:$0xf]
          %v248 = vld [vmem:[%s232 + $0x58] sm:$0xf]
          %vm249 = vcmask 60416
          %250 = vst.msk [vmem:[#allocation2] sm:$0xf] %vm249, %v233
          %251 = vst.msk [vmem:[#allocation2 + $0x4] sm:$0xf] %vm249, %v234
          %252 = vst.msk [vmem:[#allocation2 + $0x8] sm:$0xf] %vm249, %v235
          %253 = vst.msk [vmem:[#allocation2 + $0xc] sm:$0xf] %vm249, %v236
          %254 = vst.msk [vmem:[#allocation2 + $0x10] sm:$0xf] %vm249, %v237
          %255 = vst.msk [vmem:[#allocation2 + $0x14] sm:$0xf] %vm249, %v238
          %256 = vst.msk [vmem:[#allocation2 + $0x18] sm:$0xf] %vm249, %v239
          %257 = vst.msk [vmem:[#allocation2 + $0x1c] sm:$0xf] %vm249, %v240
          %258 = vst.msk [vmem:[#allocation2 + $0x20] sm:$0xf] %vm249, %v241
          %259 = vst.msk [vmem:[#allocation2 + $0x24] sm:$0xf] %vm249, %v242
          %260 = vst.msk [vmem:[#allocation2 + $0x28] sm:$0xf] %vm249, %v243
          %261 = vst.msk [vmem:[#allocation2 + $0x2c] sm:$0xf] %vm249, %v244
          %262 = vst.msk [vmem:[#allocation2 + $0x30] sm:$0xf] %vm249, %v245
          %263 = vst.msk [vmem:[#allocation2 + $0x34] sm:$0xf] %vm249, %v246
          %264 = vst.msk [vmem:[#allocation2 + $0x38] sm:$0xf] %vm249, %v247
          %265 = vst.msk [vmem:[#allocation2 + $0x3c] sm:$0xf] %vm249, %v248
          %v266 = vld [vmem:[%s232] sm:$0xf]
          %v267 = vld [vmem:[%s232 + $0x4] sm:$0xf]
          %v268 = vld [vmem:[%s232 + $0x8] sm:$0x1]
          %v269 = vld [vmem:[%s232 + $0xc] sm:$0xf]
          %v270 = vld [vmem:[%s232 + $0x10] sm:$0xf]
          %v271 = vld [vmem:[%s232 + $0x14] sm:$0x1]
          %v272 = vld [vmem:[%s232 + $0x18] sm:$0xf]
          %v273 = vld [vmem:[%s232 + $0x1c] sm:$0xf]
          %v274 = vld [vmem:[%s232 + $0x20] sm:$0x1]
          %v275 = vld [vmem:[%s232 + $0x24] sm:$0xf]
          %v276 = vld [vmem:[%s232 + $0x28] sm:$0xf]
          %v277 = vld [vmem:[%s232 + $0x2c] sm:$0x1]
          %v278 = vld [vmem:[%s232 + $0x30] sm:$0xf]
          %v279 = vld [vmem:[%s232 + $0x34] sm:$0xf]
          %v280 = vld [vmem:[%s232 + $0x38] sm:$0x1]
          %v281 = vld [vmem:[%s232 + $0x3c] sm:$0xf]
          %v282 = vld [vmem:[%s232 + $0x40] sm:$0xf]
          %v283 = vld [vmem:[%s232 + $0x44] sm:$0x1]
          %v284 = vld [vmem:[%s232 + $0x48] sm:$0xf]
          %v285 = vld [vmem:[%s232 + $0x4c] sm:$0xf]
          %v286 = vld [vmem:[%s232 + $0x50] sm:$0x1]
          %v287 = vld [vmem:[%s232 + $0x54] sm:$0xf]
          %v288 = vld [vmem:[%s232 + $0x58] sm:$0xf]
          %v289 = vld [vmem:[%s232 + $0x5c] sm:$0x1]
          %vm290 = vsmask.f32 3328
          %vm291 = vsmask.f32 7440
          %vm292 = vmor %vm290, %vm291
          %v294 = vshrl.u32 %v266, 16
          %v296 = vrot.slane %v294, 4
          %v297 = vshll.u32 %v266, 16
          %v299 = vrot.slane %v297, 5
          %v300 = vor.u32 %v296, %v299
          %v301 = vrot.slane %v300, 4
          %v303 = vshll.u32 %v267, 16
          %v305 = vrot.slane %v303, 5
          %v306 = vsel %vm292, %v301, %v305
          %v307 = vshrl.u32 %v267, 16
          %v309 = vrot.slane %v307, 4
          %v310 = vor.u32 %v309, %v305
          %v311 = vrot.slane %v310, 4
          %v313 = vshll.u32 %v268, 16
          %v315 = vrot.slane %v313, 5
          %v316 = vsel %vm292, %v311, %v315
          %v318 = vshrl.u32 %v269, 16
          %v320 = vrot.slane %v318, 4
          %v321 = vshll.u32 %v269, 16
          %v323 = vrot.slane %v321, 5
          %v324 = vor.u32 %v320, %v323
          %v325 = vrot.slane %v324, 4
          %v327 = vshll.u32 %v270, 16
          %v329 = vrot.slane %v327, 5
          %v330 = vsel %vm292, %v325, %v329
          %v331 = vshrl.u32 %v270, 16
          %v333 = vrot.slane %v331, 4
          %v334 = vor.u32 %v333, %v329
          %v335 = vrot.slane %v334, 4
          %v337 = vshll.u32 %v271, 16
          %v339 = vrot.slane %v337, 5
          %v340 = vsel %vm292, %v335, %v339
          %v342 = vshrl.u32 %v272, 16
          %v344 = vrot.slane %v342, 4
          %v345 = vshll.u32 %v272, 16
          %v347 = vrot.slane %v345, 5
          %v348 = vor.u32 %v344, %v347
          %v349 = vrot.slane %v348, 4
          %v351 = vshll.u32 %v273, 16
          %v353 = vrot.slane %v351, 5
          %v354 = vsel %vm292, %v349, %v353
          %v355 = vshrl.u32 %v273, 16
          %v357 = vrot.slane %v355, 4
          %v358 = vor.u32 %v357, %v353
          %v359 = vrot.slane %v358, 4
          %v361 = vshll.u32 %v274, 16
          %v363 = vrot.slane %v361, 5
          %v364 = vsel %vm292, %v359, %v363
          %v366 = vshrl.u32 %v275, 16
          %v368 = vrot.slane %v366, 4
          %v369 = vshll.u32 %v275, 16
          %v371 = vrot.slane %v369, 5
          %v372 = vor.u32 %v368, %v371
          %v373 = vrot.slane %v372, 4
          %v375 = vshll.u32 %v276, 16
          %v377 = vrot.slane %v375, 5
          %v378 = vsel %vm292, %v373, %v377
          %v379 = vshrl.u32 %v276, 16
          %v381 = vrot.slane %v379, 4
          %v382 = vor.u32 %v381, %v377
          %v383 = vrot.slane %v382, 4
          %v385 = vshll.u32 %v277, 16
          %v387 = vrot.slane %v385, 5
          %v388 = vsel %vm292, %v383, %v387
          %v390 = vshrl.u32 %v278, 16
          %v392 = vrot.slane %v390, 4
          %v393 = vshll.u32 %v278, 16
          %v395 = vrot.slane %v393, 5
          %v396 = vor.u32 %v392, %v395
          %v397 = vrot.slane %v396, 4
          %v399 = vshll.u32 %v279, 16
          %v401 = vrot.slane %v399, 5
          %v402 = vsel %vm292, %v397, %v401
          %v403 = vshrl.u32 %v279, 16
          %v405 = vrot.slane %v403, 4
          %v406 = vor.u32 %v405, %v401
          %v407 = vrot.slane %v406, 4
          %v409 = vshll.u32 %v280, 16
          %v411 = vrot.slane %v409, 5
          %v412 = vsel %vm292, %v407, %v411
          %v414 = vshrl.u32 %v281, 16
          %v416 = vrot.slane %v414, 4
          %v417 = vshll.u32 %v281, 16
          %v419 = vrot.slane %v417, 5
          %v420 = vor.u32 %v416, %v419
          %v421 = vrot.slane %v420, 4
          %v423 = vshll.u32 %v282, 16
          %v425 = vrot.slane %v423, 5
          %v426 = vsel %vm292, %v421, %v425
          %v427 = vshrl.u32 %v282, 16
          %v429 = vrot.slane %v427, 4
          %v430 = vor.u32 %v429, %v425
          %v431 = vrot.slane %v430, 4
          %v433 = vshll.u32 %v283, 16
          %v435 = vrot.slane %v433, 5
          %v436 = vsel %vm292, %v431, %v435
          %v438 = vshrl.u32 %v284, 16
          %v440 = vrot.slane %v438, 4
          %v441 = vshll.u32 %v284, 16
          %v443 = vrot.slane %v441, 5
          %v444 = vor.u32 %v440, %v443
          %v445 = vrot.slane %v444, 4
          %v447 = vshll.u32 %v285, 16
          %v449 = vrot.slane %v447, 5
          %v450 = vsel %vm292, %v445, %v449
          %v451 = vshrl.u32 %v285, 16
          %v453 = vrot.slane %v451, 4
          %v454 = vor.u32 %v453, %v449
          %v455 = vrot.slane %v454, 4
          %v457 = vshll.u32 %v286, 16
          %v459 = vrot.slane %v457, 5
          %v460 = vsel %vm292, %v455, %v459
          %v462 = vshrl.u32 %v287, 16
          %v464 = vrot.slane %v462, 4
          %v465 = vshll.u32 %v287, 16
          %v467 = vrot.slane %v465, 5
          %v468 = vor.u32 %v464, %v467
          %v469 = vrot.slane %v468, 4
          %v471 = vshll.u32 %v288, 16
          %v473 = vrot.slane %v471, 5
          %v474 = vsel %vm292, %v469, %v473
          %v475 = vshrl.u32 %v288, 16
          %v477 = vrot.slane %v475, 4
          %v478 = vor.u32 %v477, %v473
          %v479 = vrot.slane %v478, 4
          %v481 = vshll.u32 %v289, 16
          %v483 = vrot.slane %v481, 5
          %v484 = vsel %vm292, %v479, %v483
          %485 = vrot.lane.b32.xlu0 %v306, 8
          %v486 = vpop.permute.xlu0 %485
          %487 = vrot.lane.b32.xlu0 %v316, 8
          %v488 = vpop.permute.xlu0 %487
          %489 = vrot.lane.b32.xlu0 %v330, 8
          %v490 = vpop.permute.xlu0 %489
          %491 = vrot.lane.b32.xlu0 %v340, 8
          %v492 = vpop.permute.xlu0 %491
          %493 = vrot.lane.b32.xlu0 %v354, 8
          %v494 = vpop.permute.xlu0 %493
          %495 = vrot.lane.b32.xlu0 %v364, 8
          %v496 = vpop.permute.xlu0 %495
          %497 = vrot.lane.b32.xlu0 %v378, 8
          %v498 = vpop.permute.xlu0 %497
          %499 = vrot.lane.b32.xlu0 %v388, 8
          %v500 = vpop.permute.xlu0 %499
          %501 = vrot.lane.b32.xlu0 %v402, 8
          %v502 = vpop.permute.xlu0 %501
          %503 = vrot.lane.b32.xlu0 %v412, 8
          %v504 = vpop.permute.xlu0 %503
          %505 = vrot.lane.b32.xlu0 %v426, 8
          %v506 = vpop.permute.xlu0 %505
          %507 = vrot.lane.b32.xlu0 %v436, 8
          %v508 = vpop.permute.xlu0 %507
          %509 = vrot.lane.b32.xlu0 %v450, 8
          %v510 = vpop.permute.xlu0 %509
          %511 = vrot.lane.b32.xlu0 %v460, 8
          %v512 = vpop.permute.xlu0 %511
          %513 = vrot.lane.b32.xlu0 %v474, 8
          %v514 = vpop.permute.xlu0 %513
          %515 = vrot.lane.b32.xlu0 %v484, 8
          %v516 = vpop.permute.xlu0 %515
          %vm533 = vcmask 126016
          %534 = vst.msk [vmem:[#allocation2] sm:$0xf] %vm533, %v486
          %535 = vst.msk [vmem:[#allocation2 + $0x4] sm:$0xf] %vm533, %v488
          %536 = vst.msk [vmem:[#allocation2 + $0x8] sm:$0xf] %vm533, %v490
          %537 = vst.msk [vmem:[#allocation2 + $0xc] sm:$0xf] %vm533, %v492
          %538 = vst.msk [vmem:[#allocation2 + $0x10] sm:$0xf] %vm533, %v494
          %539 = vst.msk [vmem:[#allocation2 + $0x14] sm:$0xf] %vm533, %v496
          %540 = vst.msk [vmem:[#allocation2 + $0x18] sm:$0xf] %vm533, %v498
          %541 = vst.msk [vmem:[#allocation2 + $0x1c] sm:$0xf] %vm533, %v500
          %542 = vst.msk [vmem:[#allocation2 + $0x20] sm:$0xf] %vm533, %v502
          %543 = vst.msk [vmem:[#allocation2 + $0x24] sm:$0xf] %vm533, %v504
          %544 = vst.msk [vmem:[#allocation2 + $0x28] sm:$0xf] %vm533, %v506
          %545 = vst.msk [vmem:[#allocation2 + $0x2c] sm:$0xf] %vm533, %v508
          %546 = vst.msk [vmem:[#allocation2 + $0x30] sm:$0xf] %vm533, %v510
          %547 = vst.msk [vmem:[#allocation2 + $0x34] sm:$0xf] %vm533, %v512
          %548 = vst.msk [vmem:[#allocation2 + $0x38] sm:$0xf] %vm533, %v514
          %549 = vst.msk [vmem:[#allocation2 + $0x3c] sm:$0xf] %vm533, %v516
          %v550 = vld [vmem:[%s232] sm:$0xe]
          %v551 = vld [vmem:[%s232 + $0x4] sm:$0xf]
          %v552 = vld [vmem:[%s232 + $0x8] sm:$0x1]
          %v553 = vld [vmem:[%s232 + $0xc] sm:$0xe]
          %v554 = vld [vmem:[%s232 + $0x10] sm:$0xf]
          %v555 = vld [vmem:[%s232 + $0x14] sm:$0x1]
          %v556 = vld [vmem:[%s232 + $0x18] sm:$0xe]
          %v557 = vld [vmem:[%s232 + $0x1c] sm:$0xf]
          %v558 = vld [vmem:[%s232 + $0x20] sm:$0x1]
          %v559 = vld [vmem:[%s232 + $0x24] sm:$0xe]
          %v560 = vld [vmem:[%s232 + $0x28] sm:$0xf]
          %v561 = vld [vmem:[%s232 + $0x2c] sm:$0x1]
          %v562 = vld [vmem:[%s232 + $0x30] sm:$0xe]
          %v563 = vld [vmem:[%s232 + $0x34] sm:$0xf]
          %v564 = vld [vmem:[%s232 + $0x38] sm:$0x1]
          %v565 = vld [vmem:[%s232 + $0x3c] sm:$0xe]
          %v566 = vld [vmem:[%s232 + $0x40] sm:$0xf]
          %v567 = vld [vmem:[%s232 + $0x44] sm:$0x1]
          %v568 = vld [vmem:[%s232 + $0x48] sm:$0xe]
          %v569 = vld [vmem:[%s232 + $0x4c] sm:$0xf]
          %v570 = vld [vmem:[%s232 + $0x50] sm:$0x1]
          %v571 = vld [vmem:[%s232 + $0x54] sm:$0xe]
          %v572 = vld [vmem:[%s232 + $0x58] sm:$0xf]
          %v573 = vld [vmem:[%s232 + $0x5c] sm:$0x1]
          %vm598 = vcmask 1042432
          %vm599 = vcmask 1046532
          %vm600 = vmor %vm598, %vm599
          %v601 = vrot.slane %v550, 5
          %v602 = vrot.slane %v601, 4
          %v603 = vrot.slane %v551, 5
          %v604 = vsel %vm600, %v602, %v603
          %v605 = vrot.slane %v603, 4
          %v606 = vrot.slane %v552, 5
          %v607 = vsel %vm600, %v605, %v606
          %v608 = vrot.slane %v553, 5
          %v609 = vrot.slane %v608, 4
          %v610 = vrot.slane %v554, 5
          %v611 = vsel %vm600, %v609, %v610
          %v612 = vrot.slane %v610, 4
          %v613 = vrot.slane %v555, 5
          %v614 = vsel %vm600, %v612, %v613
          %v615 = vrot.slane %v556, 5
          %v616 = vrot.slane %v615, 4
          %v617 = vrot.slane %v557, 5
          %v618 = vsel %vm600, %v616, %v617
          %v619 = vrot.slane %v617, 4
          %v620 = vrot.slane %v558, 5
          %v621 = vsel %vm600, %v619, %v620
          %v622 = vrot.slane %v559, 5
          %v623 = vrot.slane %v622, 4
          %v624 = vrot.slane %v560, 5
          %v625 = vsel %vm600, %v623, %v624
          %v626 = vrot.slane %v624, 4
          %v627 = vrot.slane %v561, 5
          %v628 = vsel %vm600, %v626, %v627
          %v629 = vrot.slane %v562, 5
          %v630 = vrot.slane %v629, 4
          %v631 = vrot.slane %v563, 5
          %v632 = vsel %vm600, %v630, %v631
          %v633 = vrot.slane %v631, 4
          %v634 = vrot.slane %v564, 5
          %v635 = vsel %vm600, %v633, %v634
          %v636 = vrot.slane %v565, 5
          %v637 = vrot.slane %v636, 4
          %v638 = vrot.slane %v566, 5
          %v639 = vsel %vm600, %v637, %v638
          %v640 = vrot.slane %v638, 4
          %v641 = vrot.slane %v567, 5
          %v642 = vsel %vm600, %v640, %v641
          %v643 = vrot.slane %v568, 5
          %v644 = vrot.slane %v643, 4
          %v645 = vrot.slane %v569, 5
          %v646 = vsel %vm600, %v644, %v645
          %v647 = vrot.slane %v645, 4
          %v648 = vrot.slane %v570, 5
          %v649 = vsel %vm600, %v647, %v648
          %v650 = vrot.slane %v571, 5
          %v651 = vrot.slane %v650, 4
          %v652 = vrot.slane %v572, 5
          %v653 = vsel %vm600, %v651, %v652
          %v654 = vrot.slane %v652, 4
          %v655 = vrot.slane %v573, 5
          %v656 = vsel %vm600, %v654, %v655
          %657 = vrot.lane.b32.xlu0 %v604, 16
          %v658 = vpop.permute.xlu0 %657
          %659 = vrot.lane.b32.xlu0 %v607, 16
          %v660 = vpop.permute.xlu0 %659
          %661 = vrot.lane.b32.xlu0 %v611, 16
          %v662 = vpop.permute.xlu0 %661
          %663 = vrot.lane.b32.xlu0 %v614, 16
          %v664 = vpop.permute.xlu0 %663
          %665 = vrot.lane.b32.xlu0 %v618, 16
          %v666 = vpop.permute.xlu0 %665
          %667 = vrot.lane.b32.xlu0 %v621, 16
          %v668 = vpop.permute.xlu0 %667
          %669 = vrot.lane.b32.xlu0 %v625, 16
          %v670 = vpop.permute.xlu0 %669
          %671 = vrot.lane.b32.xlu0 %v628, 16
          %v672 = vpop.permute.xlu0 %671
          %673 = vrot.lane.b32.xlu0 %v632, 16
          %v674 = vpop.permute.xlu0 %673
          %675 = vrot.lane.b32.xlu0 %v635, 16
          %v676 = vpop.permute.xlu0 %675
          %677 = vrot.lane.b32.xlu0 %v639, 16
          %v678 = vpop.permute.xlu0 %677
          %679 = vrot.lane.b32.xlu0 %v642, 16
          %v680 = vpop.permute.xlu0 %679
          %681 = vrot.lane.b32.xlu0 %v646, 16
          %v682 = vpop.permute.xlu0 %681
          %683 = vrot.lane.b32.xlu0 %v649, 16
          %v684 = vpop.permute.xlu0 %683
          %685 = vrot.lane.b32.xlu0 %v653, 16
          %v686 = vpop.permute.xlu0 %685
          %687 = vrot.lane.b32.xlu0 %v656, 16
          %v688 = vpop.permute.xlu0 %687
          %vm705 = vcmask 191616
          %706 = vst.msk [vmem:[#allocation2] sm:$0xf] %vm705, %v658
          %707 = vst.msk [vmem:[#allocation2 + $0x4] sm:$0xf] %vm705, %v660
          %708 = vst.msk [vmem:[#allocation2 + $0x8] sm:$0xf] %vm705, %v662
          %709 = vst.msk [vmem:[#allocation2 + $0xc] sm:$0xf] %vm705, %v664
          %710 = vst.msk [vmem:[#allocation2 + $0x10] sm:$0xf] %vm705, %v666
          %711 = vst.msk [vmem:[#allocation2 + $0x14] sm:$0xf] %vm705, %v668
          %712 = vst.msk [vmem:[#allocation2 + $0x18] sm:$0xf] %vm705, %v670
          %713 = vst.msk [vmem:[#allocation2 + $0x1c] sm:$0xf] %vm705, %v672
          %714 = vst.msk [vmem:[#allocation2 + $0x20] sm:$0xf] %vm705, %v674
          %715 = vst.msk [vmem:[#allocation2 + $0x24] sm:$0xf] %vm705, %v676
          %716 = vst.msk [vmem:[#allocation2 + $0x28] sm:$0xf] %vm705, %v678
          %717 = vst.msk [vmem:[#allocation2 + $0x2c] sm:$0xf] %vm705, %v680
          %718 = vst.msk [vmem:[#allocation2 + $0x30] sm:$0xf] %vm705, %v682
          %719 = vst.msk [vmem:[#allocation2 + $0x34] sm:$0xf] %vm705, %v684
          %720 = vst.msk [vmem:[#allocation2 + $0x38] sm:$0xf] %vm705, %v686
          %721 = vst.msk [vmem:[#allocation2 + $0x3c] sm:$0xf] %vm705, %v688
          %s722 = sadd.s32 %s225, 1
          %s723 = smul.u32 %s722, 3
          %s724 = smul.addr %s723, 4
          %s725 = scalar_lea.vmem %s215, %s724
          %v726 = vld [vmem:[%s725] sm:$0xf]
          %v727 = vld [vmem:[%s725 + $0x4] sm:$0xf]
          %v728 = vld [vmem:[%s725 + $0xc] sm:$0xf]
          %v729 = vld [vmem:[%s725 + $0x10] sm:$0xf]
          %v730 = vld [vmem:[%s725 + $0x18] sm:$0xf]
          %v731 = vld [vmem:[%s725 + $0x1c] sm:$0xf]
          %v732 = vld [vmem:[%s725 + $0x24] sm:$0xf]
          %v733 = vld [vmem:[%s725 + $0x28] sm:$0xf]
          %v734 = vld [vmem:[%s725 + $0x30] sm:$0xf]
          %v735 = vld [vmem:[%s725 + $0x34] sm:$0xf]
          %v736 = vld [vmem:[%s725 + $0x3c] sm:$0xf]
          %v737 = vld [vmem:[%s725 + $0x40] sm:$0xf]
          %v738 = vld [vmem:[%s725 + $0x48] sm:$0xf]
          %v739 = vld [vmem:[%s725 + $0x4c] sm:$0xf]
          %v740 = vld [vmem:[%s725 + $0x54] sm:$0xf]
          %v741 = vld [vmem:[%s725 + $0x58] sm:$0xf]
          %758 = vrot.lane.b32.xlu0 %v726, 24
          %v759 = vpop.permute.xlu0 %758
          %760 = vrot.lane.b32.xlu0 %v727, 24
          %v761 = vpop.permute.xlu0 %760
          %762 = vrot.lane.b32.xlu0 %v728, 24
          %v763 = vpop.permute.xlu0 %762
          %764 = vrot.lane.b32.xlu0 %v729, 24
          %v765 = vpop.permute.xlu0 %764
          %766 = vrot.lane.b32.xlu0 %v730, 24
          %v767 = vpop.permute.xlu0 %766
          %768 = vrot.lane.b32.xlu0 %v731, 24
          %v769 = vpop.permute.xlu0 %768
          %770 = vrot.lane.b32.xlu0 %v732, 24
          %v771 = vpop.permute.xlu0 %770
          %772 = vrot.lane.b32.xlu0 %v733, 24
          %v773 = vpop.permute.xlu0 %772
          %774 = vrot.lane.b32.xlu0 %v734, 24
          %v775 = vpop.permute.xlu0 %774
          %776 = vrot.lane.b32.xlu0 %v735, 24
          %v777 = vpop.permute.xlu0 %776
          %778 = vrot.lane.b32.xlu0 %v736, 24
          %v779 = vpop.permute.xlu0 %778
          %780 = vrot.lane.b32.xlu0 %v737, 24
          %v781 = vpop.permute.xlu0 %780
          %782 = vrot.lane.b32.xlu0 %v738, 24
          %v783 = vpop.permute.xlu0 %782
          %784 = vrot.lane.b32.xlu0 %v739, 24
          %v785 = vpop.permute.xlu0 %784
          %786 = vrot.lane.b32.xlu0 %v740, 24
          %v787 = vpop.permute.xlu0 %786
          %788 = vrot.lane.b32.xlu0 %v741, 24
          %v789 = vpop.permute.xlu0 %788
          %vm806 = vcmask 257216
          %807 = vst.msk [vmem:[#allocation2] sm:$0xf] %vm806, %v759
          %808 = vst.msk [vmem:[#allocation2 + $0x4] sm:$0xf] %vm806, %v761
          %809 = vst.msk [vmem:[#allocation2 + $0x8] sm:$0xf] %vm806, %v763
          %810 = vst.msk [vmem:[#allocation2 + $0xc] sm:$0xf] %vm806, %v765
          %811 = vst.msk [vmem:[#allocation2 + $0x10] sm:$0xf] %vm806, %v767
          %812 = vst.msk [vmem:[#allocation2 + $0x14] sm:$0xf] %vm806, %v769
          %813 = vst.msk [vmem:[#allocation2 + $0x18] sm:$0xf] %vm806, %v771
          %814 = vst.msk [vmem:[#allocation2 + $0x1c] sm:$0xf] %vm806, %v773
          %815 = vst.msk [vmem:[#allocation2 + $0x20] sm:$0xf] %vm806, %v775
          %816 = vst.msk [vmem:[#allocation2 + $0x24] sm:$0xf] %vm806, %v777
          %817 = vst.msk [vmem:[#allocation2 + $0x28] sm:$0xf] %vm806, %v779
          %818 = vst.msk [vmem:[#allocation2 + $0x2c] sm:$0xf] %vm806, %v781
          %819 = vst.msk [vmem:[#allocation2 + $0x30] sm:$0xf] %vm806, %v783
          %820 = vst.msk [vmem:[#allocation2 + $0x34] sm:$0xf] %vm806, %v785
          %821 = vst.msk [vmem:[#allocation2 + $0x38] sm:$0xf] %vm806, %v787
          %822 = vst.msk [vmem:[#allocation2 + $0x3c] sm:$0xf] %vm806, %v789
          %v823 = vld [vmem:[%s725] sm:$0xf]
          %v824 = vld [vmem:[%s725 + $0x4] sm:$0xf]
          %v825 = vld [vmem:[%s725 + $0x8] sm:$0x1]
          %v826 = vld [vmem:[%s725 + $0xc] sm:$0xf]
          %v827 = vld [vmem:[%s725 + $0x10] sm:$0xf]
          %v828 = vld [vmem:[%s725 + $0x14] sm:$0x1]
          %v829 = vld [vmem:[%s725 + $0x18] sm:$0xf]
          %v830 = vld [vmem:[%s725 + $0x1c] sm:$0xf]
          %v831 = vld [vmem:[%s725 + $0x20] sm:$0x1]
          %v832 = vld [vmem:[%s725 + $0x24] sm:$0xf]
          %v833 = vld [vmem:[%s725 + $0x28] sm:$0xf]
          %v834 = vld [vmem:[%s725 + $0x2c] sm:$0x1]
          %v835 = vld [vmem:[%s725 + $0x30] sm:$0xf]
          %v836 = vld [vmem:[%s725 + $0x34] sm:$0xf]
          %v837 = vld [vmem:[%s725 + $0x38] sm:$0x1]
          %v838 = vld [vmem:[%s725 + $0x3c] sm:$0xf]
          %v839 = vld [vmem:[%s725 + $0x40] sm:$0xf]
          %v840 = vld [vmem:[%s725 + $0x44] sm:$0x1]
          %v841 = vld [vmem:[%s725 + $0x48] sm:$0xf]
          %v842 = vld [vmem:[%s725 + $0x4c] sm:$0xf]
          %v843 = vld [vmem:[%s725 + $0x50] sm:$0x1]
          %v844 = vld [vmem:[%s725 + $0x54] sm:$0xf]
          %v845 = vld [vmem:[%s725 + $0x58] sm:$0xf]
          %v846 = vld [vmem:[%s725 + $0x5c] sm:$0x1]
          %v848 = vshrl.u32 %v823, 16
          %v850 = vrot.slane %v848, 4
          %v851 = vshll.u32 %v823, 16
          %v853 = vrot.slane %v851, 5
          %v854 = vor.u32 %v850, %v853
          %v855 = vrot.slane %v854, 4
          %v857 = vshll.u32 %v824, 16
          %v859 = vrot.slane %v857, 5
          %v860 = vsel %vm292, %v855, %v859
          %v861 = vshrl.u32 %v824, 16
          %v863 = vrot.slane %v861, 4
          %v864 = vor.u32 %v863, %v859
          %v865 = vrot.slane %v864, 4
          %v867 = vshll.u32 %v825, 16
          %v869 = vrot.slane %v867, 5
          %v870 = vsel %vm292, %v865, %v869
          %v872 = vshrl.u32 %v826, 16
          %v874 = vrot.slane %v872, 4
          %v875 = vshll.u32 %v826, 16
          %v877 = vrot.slane %v875, 5
          %v878 = vor.u32 %v874, %v877
          %v879 = vrot.slane %v878, 4
          %v881 = vshll.u32 %v827, 16
          %v883 = vrot.slane %v881, 5
          %v884 = vsel %vm292, %v879, %v883
          %v885 = vshrl.u32 %v827, 16
          %v887 = vrot.slane %v885, 4
          %v888 = vor.u32 %v887, %v883
          %v889 = vrot.slane %v888, 4
          %v891 = vshll.u32 %v828, 16
          %v893 = vrot.slane %v891, 5
          %v894 = vsel %vm292, %v889, %v893
          %v896 = vshrl.u32 %v829, 16
          %v898 = vrot.slane %v896, 4
          %v899 = vshll.u32 %v829, 16
          %v901 = vrot.slane %v899, 5
          %v902 = vor.u32 %v898, %v901
          %v903 = vrot.slane %v902, 4
          %v905 = vshll.u32 %v830, 16
          %v907 = vrot.slane %v905, 5
          %v908 = vsel %vm292, %v903, %v907
          %v909 = vshrl.u32 %v830, 16
          %v911 = vrot.slane %v909, 4
          %v912 = vor.u32 %v911, %v907
          %v913 = vrot.slane %v912, 4
          %v915 = vshll.u32 %v831, 16
          %v917 = vrot.slane %v915, 5
          %v918 = vsel %vm292, %v913, %v917
          %v920 = vshrl.u32 %v832, 16
          %v922 = vrot.slane %v920, 4
          %v923 = vshll.u32 %v832, 16
          %v925 = vrot.slane %v923, 5
          %v926 = vor.u32 %v922, %v925
          %v927 = vrot.slane %v926, 4
          %v929 = vshll.u32 %v833, 16
          %v931 = vrot.slane %v929, 5
          %v932 = vsel %vm292, %v927, %v931
          %v933 = vshrl.u32 %v833, 16
          %v935 = vrot.slane %v933, 4
          %v936 = vor.u32 %v935, %v931
          %v937 = vrot.slane %v936, 4
          %v939 = vshll.u32 %v834, 16
          %v941 = vrot.slane %v939, 5
          %v942 = vsel %vm292, %v937, %v941
          %v944 = vshrl.u32 %v835, 16
          %v946 = vrot.slane %v944, 4
          %v947 = vshll.u32 %v835, 16
          %v949 = vrot.slane %v947, 5
          %v950 = vor.u32 %v946, %v949
          %v951 = vrot.slane %v950, 4
          %v953 = vshll.u32 %v836, 16
          %v955 = vrot.slane %v953, 5
          %v956 = vsel %vm292, %v951, %v955
          %v957 = vshrl.u32 %v836, 16
          %v959 = vrot.slane %v957, 4
          %v960 = vor.u32 %v959, %v955
          %v961 = vrot.slane %v960, 4
          %v963 = vshll.u32 %v837, 16
          %v965 = vrot.slane %v963, 5
          %v966 = vsel %vm292, %v961, %v965
          %v968 = vshrl.u32 %v838, 16
          %v970 = vrot.slane %v968, 4
          %v971 = vshll.u32 %v838, 16
          %v973 = vrot.slane %v971, 5
          %v974 = vor.u32 %v970, %v973
          %v975 = vrot.slane %v974, 4
          %v977 = vshll.u32 %v839, 16
          %v979 = vrot.slane %v977, 5
          %v980 = vsel %vm292, %v975, %v979
          %v981 = vshrl.u32 %v839, 16
          %v983 = vrot.slane %v981, 4
          %v984 = vor.u32 %v983, %v979
          %v985 = vrot.slane %v984, 4
          %v987 = vshll.u32 %v840, 16
          %v989 = vrot.slane %v987, 5
          %v990 = vsel %vm292, %v985, %v989
          %v992 = vshrl.u32 %v841, 16
          %v994 = vrot.slane %v992, 4
          %v995 = vshll.u32 %v841, 16
          %v997 = vrot.slane %v995, 5
          %v998 = vor.u32 %v994, %v997
          %v999 = vrot.slane %v998, 4
          %v1001 = vshll.u32 %v842, 16
          %v1003 = vrot.slane %v1001, 5
          %v1004 = vsel %vm292, %v999, %v1003
          %v1005 = vshrl.u32 %v842, 16
          %v1007 = vrot.slane %v1005, 4
          %v1008 = vor.u32 %v1007, %v1003
          %v1009 = vrot.slane %v1008, 4
          %v1011 = vshll.u32 %v843, 16
          %v1013 = vrot.slane %v1011, 5
          %v1014 = vsel %vm292, %v1009, %v1013
          %v1016 = vshrl.u32 %v844, 16
          %v1018 = vrot.slane %v1016, 4
          %v1019 = vshll.u32 %v844, 16
          %v1021 = vrot.slane %v1019, 5
          %v1022 = vor.u32 %v1018, %v1021
          %v1023 = vrot.slane %v1022, 4
          %v1025 = vshll.u32 %v845, 16
          %v1027 = vrot.slane %v1025, 5
          %v1028 = vsel %vm292, %v1023, %v1027
          %v1029 = vshrl.u32 %v845, 16
          %v1031 = vrot.slane %v1029, 4
          %v1032 = vor.u32 %v1031, %v1027
          %v1033 = vrot.slane %v1032, 4
          %v1035 = vshll.u32 %v846, 16
          %v1037 = vrot.slane %v1035, 5
          %v1038 = vsel %vm292, %v1033, %v1037
          %1039 = vrot.lane.b32.xlu0 %v860, 32
          %v1040 = vpop.permute.xlu0 %1039
          %1041 = vrot.lane.b32.xlu0 %v870, 32
          %v1042 = vpop.permute.xlu0 %1041
          %1043 = vrot.lane.b32.xlu0 %v884, 32
          %v1044 = vpop.permute.xlu0 %1043
          %1045 = vrot.lane.b32.xlu0 %v894, 32
          %v1046 = vpop.permute.xlu0 %1045
          %1047 = vrot.lane.b32.xlu0 %v908, 32
          %v1048 = vpop.permute.xlu0 %1047
          %1049 = vrot.lane.b32.xlu0 %v918, 32
          %v1050 = vpop.permute.xlu0 %1049
          %1051 = vrot.lane.b32.xlu0 %v932, 32
          %v1052 = vpop.permute.xlu0 %1051
          %1053 = vrot.lane.b32.xlu0 %v942, 32
          %v1054 = vpop.permute.xlu0 %1053
          %1055 = vrot.lane.b32.xlu0 %v956, 32
          %v1056 = vpop.permute.xlu0 %1055
          %1057 = vrot.lane.b32.xlu0 %v966, 32
          %v1058 = vpop.permute.xlu0 %1057
          %1059 = vrot.lane.b32.xlu0 %v980, 32
          %v1060 = vpop.permute.xlu0 %1059
          %1061 = vrot.lane.b32.xlu0 %v990, 32
          %v1062 = vpop.permute.xlu0 %1061
          %1063 = vrot.lane.b32.xlu0 %v1004, 32
          %v1064 = vpop.permute.xlu0 %1063
          %1065 = vrot.lane.b32.xlu0 %v1014, 32
          %v1066 = vpop.permute.xlu0 %1065
          %1067 = vrot.lane.b32.xlu0 %v1028, 32
          %v1068 = vpop.permute.xlu0 %1067
          %1069 = vrot.lane.b32.xlu0 %v1038, 32
          %v1070 = vpop.permute.xlu0 %1069
          %vm1087 = vcmask 322816
          %1088 = vst.msk [vmem:[#allocation2] sm:$0xf] %vm1087, %v1040
          %1089 = vst.msk [vmem:[#allocation2 + $0x4] sm:$0xf] %vm1087, %v1042
          %1090 = vst.msk [vmem:[#allocation2 + $0x8] sm:$0xf] %vm1087, %v1044
          %1091 = vst.msk [vmem:[#allocation2 + $0xc] sm:$0xf] %vm1087, %v1046
          %1092 = vst.msk [vmem:[#allocation2 + $0x10] sm:$0xf] %vm1087, %v1048
          %1093 = vst.msk [vmem:[#allocation2 + $0x14] sm:$0xf] %vm1087, %v1050
          %1094 = vst.msk [vmem:[#allocation2 + $0x18] sm:$0xf] %vm1087, %v1052
          %1095 = vst.msk [vmem:[#allocation2 + $0x1c] sm:$0xf] %vm1087, %v1054
          %1096 = vst.msk [vmem:[#allocation2 + $0x20] sm:$0xf] %vm1087, %v1056
          %1097 = vst.msk [vmem:[#allocation2 + $0x24] sm:$0xf] %vm1087, %v1058
          %1098 = vst.msk [vmem:[#allocation2 + $0x28] sm:$0xf] %vm1087, %v1060
          %1099 = vst.msk [vmem:[#allocation2 + $0x2c] sm:$0xf] %vm1087, %v1062
          %1100 = vst.msk [vmem:[#allocation2 + $0x30] sm:$0xf] %vm1087, %v1064
          %1101 = vst.msk [vmem:[#allocation2 + $0x34] sm:$0xf] %vm1087, %v1066
          %1102 = vst.msk [vmem:[#allocation2 + $0x38] sm:$0xf] %vm1087, %v1068
          %1103 = vst.msk [vmem:[#allocation2 + $0x3c] sm:$0xf] %vm1087, %v1070
          %v1104 = vld [vmem:[%s725] sm:$0xe]
          %v1105 = vld [vmem:[%s725 + $0x4] sm:$0xf]
          %v1106 = vld [vmem:[%s725 + $0x8] sm:$0x1]
          %v1107 = vld [vmem:[%s725 + $0xc] sm:$0xe]
          %v1108 = vld [vmem:[%s725 + $0x10] sm:$0xf]
          %v1109 = vld [vmem:[%s725 + $0x14] sm:$0x1]
          %v1110 = vld [vmem:[%s725 + $0x18] sm:$0xe]
          %v1111 = vld [vmem:[%s725 + $0x1c] sm:$0xf]
          %v1112 = vld [vmem:[%s725 + $0x20] sm:$0x1]
          %v1113 = vld [vmem:[%s725 + $0x24] sm:$0xe]
          %v1114 = vld [vmem:[%s725 + $0x28] sm:$0xf]
          %v1115 = vld [vmem:[%s725 + $0x2c] sm:$0x1]
          %v1116 = vld [vmem:[%s725 + $0x30] sm:$0xe]
          %v1117 = vld [vmem:[%s725 + $0x34] sm:$0xf]
          %v1118 = vld [vmem:[%s725 + $0x38] sm:$0x1]
          %v1119 = vld [vmem:[%s725 + $0x3c] sm:$0xe]
          %v1120 = vld [vmem:[%s725 + $0x40] sm:$0xf]
          %v1121 = vld [vmem:[%s725 + $0x44] sm:$0x1]
          %v1122 = vld [vmem:[%s725 + $0x48] sm:$0xe]
          %v1123 = vld [vmem:[%s725 + $0x4c] sm:$0xf]
          %v1124 = vld [vmem:[%s725 + $0x50] sm:$0x1]
          %v1125 = vld [vmem:[%s725 + $0x54] sm:$0xe]
          %v1126 = vld [vmem:[%s725 + $0x58] sm:$0xf]
          %v1127 = vld [vmem:[%s725 + $0x5c] sm:$0x1]
          %v1152 = vrot.slane %v1104, 5
          %v1153 = vrot.slane %v1152, 4
          %v1154 = vrot.slane %v1105, 5
          %v1155 = vsel %vm600, %v1153, %v1154
          %v1156 = vrot.slane %v1154, 4
          %v1157 = vrot.slane %v1106, 5
          %v1158 = vsel %vm600, %v1156, %v1157
          %v1159 = vrot.slane %v1107, 5
          %v1160 = vrot.slane %v1159, 4
          %v1161 = vrot.slane %v1108, 5
          %v1162 = vsel %vm600, %v1160, %v1161
          %v1163 = vrot.slane %v1161, 4
          %v1164 = vrot.slane %v1109, 5
          %v1165 = vsel %vm600, %v1163, %v1164
          %v1166 = vrot.slane %v1110, 5
          %v1167 = vrot.slane %v1166, 4
          %v1168 = vrot.slane %v1111, 5
          %v1169 = vsel %vm600, %v1167, %v1168
          %v1170 = vrot.slane %v1168, 4
          %v1171 = vrot.slane %v1112, 5
          %v1172 = vsel %vm600, %v1170, %v1171
          %v1173 = vrot.slane %v1113, 5
          %v1174 = vrot.slane %v1173, 4
          %v1175 = vrot.slane %v1114, 5
          %v1176 = vsel %vm600, %v1174, %v1175
          %v1177 = vrot.slane %v1175, 4
          %v1178 = vrot.slane %v1115, 5
          %v1179 = vsel %vm600, %v1177, %v1178
          %v1180 = vrot.slane %v1116, 5
          %v1181 = vrot.slane %v1180, 4
          %v1182 = vrot.slane %v1117, 5
          %v1183 = vsel %vm600, %v1181, %v1182
          %v1184 = vrot.slane %v1182, 4
          %v1185 = vrot.slane %v1118, 5
          %v1186 = vsel %vm600, %v1184, %v1185
          %v1187 = vrot.slane %v1119, 5
          %v1188 = vrot.slane %v1187, 4
          %v1189 = vrot.slane %v1120, 5
          %v1190 = vsel %vm600, %v1188, %v1189
          %v1191 = vrot.slane %v1189, 4
          %v1192 = vrot.slane %v1121, 5
          %v1193 = vsel %vm600, %v1191, %v1192
          %v1194 = vrot.slane %v1122, 5
          %v1195 = vrot.slane %v1194, 4
          %v1196 = vrot.slane %v1123, 5
          %v1197 = vsel %vm600, %v1195, %v1196
          %v1198 = vrot.slane %v1196, 4
          %v1199 = vrot.slane %v1124, 5
          %v1200 = vsel %vm600, %v1198, %v1199
          %v1201 = vrot.slane %v1125, 5
          %v1202 = vrot.slane %v1201, 4
          %v1203 = vrot.slane %v1126, 5
          %v1204 = vsel %vm600, %v1202, %v1203
          %v1205 = vrot.slane %v1203, 4
          %v1206 = vrot.slane %v1127, 5
          %v1207 = vsel %vm600, %v1205, %v1206
          %1208 = vrot.lane.b32.xlu0 %v1155, 40
          %v1209 = vpop.permute.xlu0 %1208
          %1210 = vrot.lane.b32.xlu0 %v1158, 40
          %v1211 = vpop.permute.xlu0 %1210
          %1212 = vrot.lane.b32.xlu0 %v1162, 40
          %v1213 = vpop.permute.xlu0 %1212
          %1214 = vrot.lane.b32.xlu0 %v1165, 40
          %v1215 = vpop.permute.xlu0 %1214
          %1216 = vrot.lane.b32.xlu0 %v1169, 40
          %v1217 = vpop.permute.xlu0 %1216
          %1218 = vrot.lane.b32.xlu0 %v1172, 40
          %v1219 = vpop.permute.xlu0 %1218
          %1220 = vrot.lane.b32.xlu0 %v1176, 40
          %v1221 = vpop.permute.xlu0 %1220
          %1222 = vrot.lane.b32.xlu0 %v1179, 40
          %v1223 = vpop.permute.xlu0 %1222
          %1224 = vrot.lane.b32.xlu0 %v1183, 40
          %v1225 = vpop.permute.xlu0 %1224
          %1226 = vrot.lane.b32.xlu0 %v1186, 40
          %v1227 = vpop.permute.xlu0 %1226
          %1228 = vrot.lane.b32.xlu0 %v1190, 40
          %v1229 = vpop.permute.xlu0 %1228
          %1230 = vrot.lane.b32.xlu0 %v1193, 40
          %v1231 = vpop.permute.xlu0 %1230
          %1232 = vrot.lane.b32.xlu0 %v1197, 40
          %v1233 = vpop.permute.xlu0 %1232
          %1234 = vrot.lane.b32.xlu0 %v1200, 40
          %v1235 = vpop.permute.xlu0 %1234
          %1236 = vrot.lane.b32.xlu0 %v1204, 40
          %v1237 = vpop.permute.xlu0 %1236
          %1238 = vrot.lane.b32.xlu0 %v1207, 40
          %v1239 = vpop.permute.xlu0 %1238
          %vm1256 = vcmask 388416
          %1257 = vst.msk [vmem:[#allocation2] sm:$0xf] %vm1256, %v1209
          %1258 = vst.msk [vmem:[#allocation2 + $0x4] sm:$0xf] %vm1256, %v1211
          %1259 = vst.msk [vmem:[#allocation2 + $0x8] sm:$0xf] %vm1256, %v1213
          %1260 = vst.msk [vmem:[#allocation2 + $0xc] sm:$0xf] %vm1256, %v1215
          %1261 = vst.msk [vmem:[#allocation2 + $0x10] sm:$0xf] %vm1256, %v1217
          %1262 = vst.msk [vmem:[#allocation2 + $0x14] sm:$0xf] %vm1256, %v1219
          %1263 = vst.msk [vmem:[#allocation2 + $0x18] sm:$0xf] %vm1256, %v1221
          %1264 = vst.msk [vmem:[#allocation2 + $0x1c] sm:$0xf] %vm1256, %v1223
          %1265 = vst.msk [vmem:[#allocation2 + $0x20] sm:$0xf] %vm1256, %v1225
          %1266 = vst.msk [vmem:[#allocation2 + $0x24] sm:$0xf] %vm1256, %v1227
          %1267 = vst.msk [vmem:[#allocation2 + $0x28] sm:$0xf] %vm1256, %v1229
          %1268 = vst.msk [vmem:[#allocation2 + $0x2c] sm:$0xf] %vm1256, %v1231
          %1269 = vst.msk [vmem:[#allocation2 + $0x30] sm:$0xf] %vm1256, %v1233
          %1270 = vst.msk [vmem:[#allocation2 + $0x34] sm:$0xf] %vm1256, %v1235
          %1271 = vst.msk [vmem:[#allocation2 + $0x38] sm:$0xf] %vm1256, %v1237
          %1272 = vst.msk [vmem:[#allocation2 + $0x3c] sm:$0xf] %vm1256, %v1239
          %s1273 = sadd.s32 %s225, 2
          %s1274 = smul.u32 %s1273, 3
          %s1275 = smul.addr %s1274, 4
          %s1276 = scalar_lea.vmem %s215, %s1275
          %v1277 = vld [vmem:[%s1276] sm:$0xf]
          %v1278 = vld [vmem:[%s1276 + $0x4] sm:$0xf]
          %v1279 = vld [vmem:[%s1276 + $0xc] sm:$0xf]
          %v1280 = vld [vmem:[%s1276 + $0x10] sm:$0xf]
          %v1281 = vld [vmem:[%s1276 + $0x18] sm:$0xf]
          %v1282 = vld [vmem:[%s1276 + $0x1c] sm:$0xf]
          %v1283 = vld [vmem:[%s1276 + $0x24] sm:$0xf]
          %v1284 = vld [vmem:[%s1276 + $0x28] sm:$0xf]
          %v1285 = vld [vmem:[%s1276 + $0x30] sm:$0xf]
          %v1286 = vld [vmem:[%s1276 + $0x34] sm:$0xf]
          %v1287 = vld [vmem:[%s1276 + $0x3c] sm:$0xf]
          %v1288 = vld [vmem:[%s1276 + $0x40] sm:$0xf]
          %v1289 = vld [vmem:[%s1276 + $0x48] sm:$0xf]
          %v1290 = vld [vmem:[%s1276 + $0x4c] sm:$0xf]
          %v1291 = vld [vmem:[%s1276 + $0x54] sm:$0xf]
          %v1292 = vld [vmem:[%s1276 + $0x58] sm:$0xf]
          %1309 = vrot.lane.b32.xlu0 %v1277, 48
          %v1310 = vpop.permute.xlu0 %1309
          %1311 = vrot.lane.b32.xlu0 %v1278, 48
          %v1312 = vpop.permute.xlu0 %1311
          %1313 = vrot.lane.b32.xlu0 %v1279, 48
          %v1314 = vpop.permute.xlu0 %1313
          %1315 = vrot.lane.b32.xlu0 %v1280, 48
          %v1316 = vpop.permute.xlu0 %1315
          %1317 = vrot.lane.b32.xlu0 %v1281, 48
          %v1318 = vpop.permute.xlu0 %1317
          %1319 = vrot.lane.b32.xlu0 %v1282, 48
          %v1320 = vpop.permute.xlu0 %1319
          %1321 = vrot.lane.b32.xlu0 %v1283, 48
          %v1322 = vpop.permute.xlu0 %1321
          %1323 = vrot.lane.b32.xlu0 %v1284, 48
          %v1324 = vpop.permute.xlu0 %1323
          %1325 = vrot.lane.b32.xlu0 %v1285, 48
          %v1326 = vpop.permute.xlu0 %1325
          %1327 = vrot.lane.b32.xlu0 %v1286, 48
          %v1328 = vpop.permute.xlu0 %1327
          %1329 = vrot.lane.b32.xlu0 %v1287, 48
          %v1330 = vpop.permute.xlu0 %1329
          %1331 = vrot.lane.b32.xlu0 %v1288, 48
          %v1332 = vpop.permute.xlu0 %1331
          %1333 = vrot.lane.b32.xlu0 %v1289, 48
          %v1334 = vpop.permute.xlu0 %1333
          %1335 = vrot.lane.b32.xlu0 %v1290, 48
          %v1336 = vpop.permute.xlu0 %1335
          %1337 = vrot.lane.b32.xlu0 %v1291, 48
          %v1338 = vpop.permute.xlu0 %1337
          %1339 = vrot.lane.b32.xlu0 %v1292, 48
          %v1340 = vpop.permute.xlu0 %1339
          %vm1357 = vcmask 454016
          %1358 = vst.msk [vmem:[#allocation2] sm:$0xf] %vm1357, %v1310
          %1359 = vst.msk [vmem:[#allocation2 + $0x4] sm:$0xf] %vm1357, %v1312
          %1360 = vst.msk [vmem:[#allocation2 + $0x8] sm:$0xf] %vm1357, %v1314
          %1361 = vst.msk [vmem:[#allocation2 + $0xc] sm:$0xf] %vm1357, %v1316
          %1362 = vst.msk [vmem:[#allocation2 + $0x10] sm:$0xf] %vm1357, %v1318
          %1363 = vst.msk [vmem:[#allocation2 + $0x14] sm:$0xf] %vm1357, %v1320
          %1364 = vst.msk [vmem:[#allocation2 + $0x18] sm:$0xf] %vm1357, %v1322
          %1365 = vst.msk [vmem:[#allocation2 + $0x1c] sm:$0xf] %vm1357, %v1324
          %1366 = vst.msk [vmem:[#allocation2 + $0x20] sm:$0xf] %vm1357, %v1326
          %1367 = vst.msk [vmem:[#allocation2 + $0x24] sm:$0xf] %vm1357, %v1328
          %1368 = vst.msk [vmem:[#allocation2 + $0x28] sm:$0xf] %vm1357, %v1330
          %1369 = vst.msk [vmem:[#allocation2 + $0x2c] sm:$0xf] %vm1357, %v1332
          %1370 = vst.msk [vmem:[#allocation2 + $0x30] sm:$0xf] %vm1357, %v1334
          %1371 = vst.msk [vmem:[#allocation2 + $0x34] sm:$0xf] %vm1357, %v1336
          %1372 = vst.msk [vmem:[#allocation2 + $0x38] sm:$0xf] %vm1357, %v1338
          %1373 = vst.msk [vmem:[#allocation2 + $0x3c] sm:$0xf] %vm1357, %v1340
          %v1374 = vld [vmem:[%s1276] sm:$0xf]
          %v1375 = vld [vmem:[%s1276 + $0x4] sm:$0xf]
          %v1376 = vld [vmem:[%s1276 + $0x8] sm:$0x1]
          %v1377 = vld [vmem:[%s1276 + $0xc] sm:$0xf]
          %v1378 = vld [vmem:[%s1276 + $0x10] sm:$0xf]
          %v1379 = vld [vmem:[%s1276 + $0x14] sm:$0x1]
          %v1380 = vld [vmem:[%s1276 + $0x18] sm:$0xf]
          %v1381 = vld [vmem:[%s1276 + $0x1c] sm:$0xf]
          %v1382 = vld [vmem:[%s1276 + $0x20] sm:$0x1]
          %v1383 = vld [vmem:[%s1276 + $0x24] sm:$0xf]
          %v1384 = vld [vmem:[%s1276 + $0x28] sm:$0xf]
          %v1385 = vld [vmem:[%s1276 + $0x2c] sm:$0x1]
          %v1386 = vld [vmem:[%s1276 + $0x30] sm:$0xf]
          %v1387 = vld [vmem:[%s1276 + $0x34] sm:$0xf]
          %v1388 = vld [vmem:[%s1276 + $0x38] sm:$0x1]
          %v1389 = vld [vmem:[%s1276 + $0x3c] sm:$0xf]
          %v1390 = vld [vmem:[%s1276 + $0x40] sm:$0xf]
          %v1391 = vld [vmem:[%s1276 + $0x44] sm:$0x1]
          %v1392 = vld [vmem:[%s1276 + $0x48] sm:$0xf]
          %v1393 = vld [vmem:[%s1276 + $0x4c] sm:$0xf]
          %v1394 = vld [vmem:[%s1276 + $0x50] sm:$0x1]
          %v1395 = vld [vmem:[%s1276 + $0x54] sm:$0xf]
          %v1396 = vld [vmem:[%s1276 + $0x58] sm:$0xf]
          %v1397 = vld [vmem:[%s1276 + $0x5c] sm:$0x1]
          %v1399 = vshrl.u32 %v1374, 16
          %v1401 = vrot.slane %v1399, 4
          %v1402 = vshll.u32 %v1374, 16
          %v1404 = vrot.slane %v1402, 5
          %v1405 = vor.u32 %v1401, %v1404
          %v1406 = vrot.slane %v1405, 4
          %v1408 = vshll.u32 %v1375, 16
          %v1410 = vrot.slane %v1408, 5
          %v1411 = vsel %vm292, %v1406, %v1410
          %v1412 = vshrl.u32 %v1375, 16
          %v1414 = vrot.slane %v1412, 4
          %v1415 = vor.u32 %v1414, %v1410
          %v1416 = vrot.slane %v1415, 4
          %v1418 = vshll.u32 %v1376, 16
          %v1420 = vrot.slane %v1418, 5
          %v1421 = vsel %vm292, %v1416, %v1420
          %v1423 = vshrl.u32 %v1377, 16
          %v1425 = vrot.slane %v1423, 4
          %v1426 = vshll.u32 %v1377, 16
          %v1428 = vrot.slane %v1426, 5
          %v1429 = vor.u32 %v1425, %v1428
          %v1430 = vrot.slane %v1429, 4
          %v1432 = vshll.u32 %v1378, 16
          %v1434 = vrot.slane %v1432, 5
          %v1435 = vsel %vm292, %v1430, %v1434
          %v1436 = vshrl.u32 %v1378, 16
          %v1438 = vrot.slane %v1436, 4
          %v1439 = vor.u32 %v1438, %v1434
          %v1440 = vrot.slane %v1439, 4
          %v1442 = vshll.u32 %v1379, 16
          %v1444 = vrot.slane %v1442, 5
          %v1445 = vsel %vm292, %v1440, %v1444
          %v1447 = vshrl.u32 %v1380, 16
          %v1449 = vrot.slane %v1447, 4
          %v1450 = vshll.u32 %v1380, 16
          %v1452 = vrot.slane %v1450, 5
          %v1453 = vor.u32 %v1449, %v1452
          %v1454 = vrot.slane %v1453, 4
          %v1456 = vshll.u32 %v1381, 16
          %v1458 = vrot.slane %v1456, 5
          %v1459 = vsel %vm292, %v1454, %v1458
          %v1460 = vshrl.u32 %v1381, 16
          %v1462 = vrot.slane %v1460, 4
          %v1463 = vor.u32 %v1462, %v1458
          %v1464 = vrot.slane %v1463, 4
          %v1466 = vshll.u32 %v1382, 16
          %v1468 = vrot.slane %v1466, 5
          %v1469 = vsel %vm292, %v1464, %v1468
          %v1471 = vshrl.u32 %v1383, 16
          %v1473 = vrot.slane %v1471, 4
          %v1474 = vshll.u32 %v1383, 16
          %v1476 = vrot.slane %v1474, 5
          %v1477 = vor.u32 %v1473, %v1476
          %v1478 = vrot.slane %v1477, 4
          %v1480 = vshll.u32 %v1384, 16
          %v1482 = vrot.slane %v1480, 5
          %v1483 = vsel %vm292, %v1478, %v1482
          %v1484 = vshrl.u32 %v1384, 16
          %v1486 = vrot.slane %v1484, 4
          %v1487 = vor.u32 %v1486, %v1482
          %v1488 = vrot.slane %v1487, 4
          %v1490 = vshll.u32 %v1385, 16
          %v1492 = vrot.slane %v1490, 5
          %v1493 = vsel %vm292, %v1488, %v1492
          %v1495 = vshrl.u32 %v1386, 16
          %v1497 = vrot.slane %v1495, 4
          %v1498 = vshll.u32 %v1386, 16
          %v1500 = vrot.slane %v1498, 5
          %v1501 = vor.u32 %v1497, %v1500
          %v1502 = vrot.slane %v1501, 4
          %v1504 = vshll.u32 %v1387, 16
          %v1506 = vrot.slane %v1504, 5
          %v1507 = vsel %vm292, %v1502, %v1506
          %v1508 = vshrl.u32 %v1387, 16
          %v1510 = vrot.slane %v1508, 4
          %v1511 = vor.u32 %v1510, %v1506
          %v1512 = vrot.slane %v1511, 4
          %v1514 = vshll.u32 %v1388, 16
          %v1516 = vrot.slane %v1514, 5
          %v1517 = vsel %vm292, %v1512, %v1516
          %v1519 = vshrl.u32 %v1389, 16
          %v1521 = vrot.slane %v1519, 4
          %v1522 = vshll.u32 %v1389, 16
          %v1524 = vrot.slane %v1522, 5
          %v1525 = vor.u32 %v1521, %v1524
          %v1526 = vrot.slane %v1525, 4
          %v1528 = vshll.u32 %v1390, 16
          %v1530 = vrot.slane %v1528, 5
          %v1531 = vsel %vm292, %v1526, %v1530
          %v1532 = vshrl.u32 %v1390, 16
          %v1534 = vrot.slane %v1532, 4
          %v1535 = vor.u32 %v1534, %v1530
          %v1536 = vrot.slane %v1535, 4
          %v1538 = vshll.u32 %v1391, 16
          %v1540 = vrot.slane %v1538, 5
          %v1541 = vsel %vm292, %v1536, %v1540
          %v1543 = vshrl.u32 %v1392, 16
          %v1545 = vrot.slane %v1543, 4
          %v1546 = vshll.u32 %v1392, 16
          %v1548 = vrot.slane %v1546, 5
          %v1549 = vor.u32 %v1545, %v1548
          %v1550 = vrot.slane %v1549, 4
          %v1552 = vshll.u32 %v1393, 16
          %v1554 = vrot.slane %v1552, 5
          %v1555 = vsel %vm292, %v1550, %v1554
          %v1556 = vshrl.u32 %v1393, 16
          %v1558 = vrot.slane %v1556, 4
          %v1559 = vor.u32 %v1558, %v1554
          %v1560 = vrot.slane %v1559, 4
          %v1562 = vshll.u32 %v1394, 16
          %v1564 = vrot.slane %v1562, 5
          %v1565 = vsel %vm292, %v1560, %v1564
          %v1567 = vshrl.u32 %v1395, 16
          %v1569 = vrot.slane %v1567, 4
          %v1570 = vshll.u32 %v1395, 16
          %v1572 = vrot.slane %v1570, 5
          %v1573 = vor.u32 %v1569, %v1572
          %v1574 = vrot.slane %v1573, 4
          %v1576 = vshll.u32 %v1396, 16
          %v1578 = vrot.slane %v1576, 5
          %v1579 = vsel %vm292, %v1574, %v1578
          %v1580 = vshrl.u32 %v1396, 16
          %v1582 = vrot.slane %v1580, 4
          %v1583 = vor.u32 %v1582, %v1578
          %v1584 = vrot.slane %v1583, 4
          %v1586 = vshll.u32 %v1397, 16
          %v1588 = vrot.slane %v1586, 5
          %v1589 = vsel %vm292, %v1584, %v1588
          %1590 = vrot.lane.b32.xlu0 %v1411, 56
          %v1591 = vpop.permute.xlu0 %1590
          %1592 = vrot.lane.b32.xlu0 %v1421, 56
          %v1593 = vpop.permute.xlu0 %1592
          %1594 = vrot.lane.b32.xlu0 %v1435, 56
          %v1595 = vpop.permute.xlu0 %1594
          %1596 = vrot.lane.b32.xlu0 %v1445, 56
          %v1597 = vpop.permute.xlu0 %1596
          %1598 = vrot.lane.b32.xlu0 %v1459, 56
          %v1599 = vpop.permute.xlu0 %1598
          %1600 = vrot.lane.b32.xlu0 %v1469, 56
          %v1601 = vpop.permute.xlu0 %1600
          %1602 = vrot.lane.b32.xlu0 %v1483, 56
          %v1603 = vpop.permute.xlu0 %1602
          %1604 = vrot.lane.b32.xlu0 %v1493, 56
          %v1605 = vpop.permute.xlu0 %1604
          %1606 = vrot.lane.b32.xlu0 %v1507, 56
          %v1607 = vpop.permute.xlu0 %1606
          %1608 = vrot.lane.b32.xlu0 %v1517, 56
          %v1609 = vpop.permute.xlu0 %1608
          %1610 = vrot.lane.b32.xlu0 %v1531, 56
          %v1611 = vpop.permute.xlu0 %1610
          %1612 = vrot.lane.b32.xlu0 %v1541, 56
          %v1613 = vpop.permute.xlu0 %1612
          %1614 = vrot.lane.b32.xlu0 %v1555, 56
          %v1615 = vpop.permute.xlu0 %1614
          %1616 = vrot.lane.b32.xlu0 %v1565, 56
          %v1617 = vpop.permute.xlu0 %1616
          %1618 = vrot.lane.b32.xlu0 %v1579, 56
          %v1619 = vpop.permute.xlu0 %1618
          %1620 = vrot.lane.b32.xlu0 %v1589, 56
          %v1621 = vpop.permute.xlu0 %1620
          %vm1638 = vcmask 519616
          %1639 = vst.msk [vmem:[#allocation2] sm:$0xf] %vm1638, %v1591
          %1640 = vst.msk [vmem:[#allocation2 + $0x4] sm:$0xf] %vm1638, %v1593
          %1641 = vst.msk [vmem:[#allocation2 + $0x8] sm:$0xf] %vm1638, %v1595
          %1642 = vst.msk [vmem:[#allocation2 + $0xc] sm:$0xf] %vm1638, %v1597
          %1643 = vst.msk [vmem:[#allocation2 + $0x10] sm:$0xf] %vm1638, %v1599
          %1644 = vst.msk [vmem:[#allocation2 + $0x14] sm:$0xf] %vm1638, %v1601
          %1645 = vst.msk [vmem:[#allocation2 + $0x18] sm:$0xf] %vm1638, %v1603
          %1646 = vst.msk [vmem:[#allocation2 + $0x1c] sm:$0xf] %vm1638, %v1605
          %1647 = vst.msk [vmem:[#allocation2 + $0x20] sm:$0xf] %vm1638, %v1607
          %1648 = vst.msk [vmem:[#allocation2 + $0x24] sm:$0xf] %vm1638, %v1609
          %1649 = vst.msk [vmem:[#allocation2 + $0x28] sm:$0xf] %vm1638, %v1611
          %1650 = vst.msk [vmem:[#allocation2 + $0x2c] sm:$0xf] %vm1638, %v1613
          %1651 = vst.msk [vmem:[#allocation2 + $0x30] sm:$0xf] %vm1638, %v1615
          %1652 = vst.msk [vmem:[#allocation2 + $0x34] sm:$0xf] %vm1638, %v1617
          %1653 = vst.msk [vmem:[#allocation2 + $0x38] sm:$0xf] %vm1638, %v1619
          %1654 = vst.msk [vmem:[#allocation2 + $0x3c] sm:$0xf] %vm1638, %v1621
          %v1655 = vld [vmem:[%s1276] sm:$0xe]
          %v1656 = vld [vmem:[%s1276 + $0x4] sm:$0xf]
          %v1657 = vld [vmem:[%s1276 + $0x8] sm:$0x1]
          %v1658 = vld [vmem:[%s1276 + $0xc] sm:$0xe]
          %v1659 = vld [vmem:[%s1276 + $0x10] sm:$0xf]
          %v1660 = vld [vmem:[%s1276 + $0x14] sm:$0x1]
          %v1661 = vld [vmem:[%s1276 + $0x18] sm:$0xe]
          %v1662 = vld [vmem:[%s1276 + $0x1c] sm:$0xf]
          %v1663 = vld [vmem:[%s1276 + $0x20] sm:$0x1]
          %v1664 = vld [vmem:[%s1276 + $0x24] sm:$0xe]
          %v1665 = vld [vmem:[%s1276 + $0x28] sm:$0xf]
          %v1666 = vld [vmem:[%s1276 + $0x2c] sm:$0x1]
          %v1667 = vld [vmem:[%s1276 + $0x30] sm:$0xe]
          %v1668 = vld [vmem:[%s1276 + $0x34] sm:$0xf]
          %v1669 = vld [vmem:[%s1276 + $0x38] sm:$0x1]
          %v1670 = vld [vmem:[%s1276 + $0x3c] sm:$0xe]
          %v1671 = vld [vmem:[%s1276 + $0x40] sm:$0xf]
          %v1672 = vld [vmem:[%s1276 + $0x44] sm:$0x1]
          %v1673 = vld [vmem:[%s1276 + $0x48] sm:$0xe]
          %v1674 = vld [vmem:[%s1276 + $0x4c] sm:$0xf]
          %v1675 = vld [vmem:[%s1276 + $0x50] sm:$0x1]
          %v1676 = vld [vmem:[%s1276 + $0x54] sm:$0xe]
          %v1677 = vld [vmem:[%s1276 + $0x58] sm:$0xf]
          %v1678 = vld [vmem:[%s1276 + $0x5c] sm:$0x1]
          %v1703 = vrot.slane %v1655, 5
          %v1704 = vrot.slane %v1703, 4
          %v1705 = vrot.slane %v1656, 5
          %v1706 = vsel %vm600, %v1704, %v1705
          %v1707 = vrot.slane %v1705, 4
          %v1708 = vrot.slane %v1657, 5
          %v1709 = vsel %vm600, %v1707, %v1708
          %v1710 = vrot.slane %v1658, 5
          %v1711 = vrot.slane %v1710, 4
          %v1712 = vrot.slane %v1659, 5
          %v1713 = vsel %vm600, %v1711, %v1712
          %v1714 = vrot.slane %v1712, 4
          %v1715 = vrot.slane %v1660, 5
          %v1716 = vsel %vm600, %v1714, %v1715
          %v1717 = vrot.slane %v1661, 5
          %v1718 = vrot.slane %v1717, 4
          %v1719 = vrot.slane %v1662, 5
          %v1720 = vsel %vm600, %v1718, %v1719
          %v1721 = vrot.slane %v1719, 4
          %v1722 = vrot.slane %v1663, 5
          %v1723 = vsel %vm600, %v1721, %v1722
          %v1724 = vrot.slane %v1664, 5
          %v1725 = vrot.slane %v1724, 4
          %v1726 = vrot.slane %v1665, 5
          %v1727 = vsel %vm600, %v1725, %v1726
          %v1728 = vrot.slane %v1726, 4
          %v1729 = vrot.slane %v1666, 5
          %v1730 = vsel %vm600, %v1728, %v1729
          %v1731 = vrot.slane %v1667, 5
          %v1732 = vrot.slane %v1731, 4
          %v1733 = vrot.slane %v1668, 5
          %v1734 = vsel %vm600, %v1732, %v1733
          %v1735 = vrot.slane %v1733, 4
          %v1736 = vrot.slane %v1669, 5
          %v1737 = vsel %vm600, %v1735, %v1736
          %v1738 = vrot.slane %v1670, 5
          %v1739 = vrot.slane %v1738, 4
          %v1740 = vrot.slane %v1671, 5
          %v1741 = vsel %vm600, %v1739, %v1740
          %v1742 = vrot.slane %v1740, 4
          %v1743 = vrot.slane %v1672, 5
          %v1744 = vsel %vm600, %v1742, %v1743
          %v1745 = vrot.slane %v1673, 5
          %v1746 = vrot.slane %v1745, 4
          %v1747 = vrot.slane %v1674, 5
          %v1748 = vsel %vm600, %v1746, %v1747
          %v1749 = vrot.slane %v1747, 4
          %v1750 = vrot.slane %v1675, 5
          %v1751 = vsel %vm600, %v1749, %v1750
          %v1752 = vrot.slane %v1676, 5
          %v1753 = vrot.slane %v1752, 4
          %v1754 = vrot.slane %v1677, 5
          %v1755 = vsel %vm600, %v1753, %v1754
          %v1756 = vrot.slane %v1754, 4
          %v1757 = vrot.slane %v1678, 5
          %v1758 = vsel %vm600, %v1756, %v1757
          %1759 = vrot.lane.b32.xlu0 %v1706, 64
          %v1760 = vpop.permute.xlu0 %1759
          %1761 = vrot.lane.b32.xlu0 %v1709, 64
          %v1762 = vpop.permute.xlu0 %1761
          %1763 = vrot.lane.b32.xlu0 %v1713, 64
          %v1764 = vpop.permute.xlu0 %1763
          %1765 = vrot.lane.b32.xlu0 %v1716, 64
          %v1766 = vpop.permute.xlu0 %1765
          %1767 = vrot.lane.b32.xlu0 %v1720, 64
          %v1768 = vpop.permute.xlu0 %1767
          %1769 = vrot.lane.b32.xlu0 %v1723, 64
          %v1770 = vpop.permute.xlu0 %1769
          %1771 = vrot.lane.b32.xlu0 %v1727, 64
          %v1772 = vpop.permute.xlu0 %1771
          %1773 = vrot.lane.b32.xlu0 %v1730, 64
          %v1774 = vpop.permute.xlu0 %1773
          %1775 = vrot.lane.b32.xlu0 %v1734, 64
          %v1776 = vpop.permute.xlu0 %1775
          %1777 = vrot.lane.b32.xlu0 %v1737, 64
          %v1778 = vpop.permute.xlu0 %1777
          %1779 = vrot.lane.b32.xlu0 %v1741, 64
          %v1780 = vpop.permute.xlu0 %1779
          %1781 = vrot.lane.b32.xlu0 %v1744, 64
          %v1782 = vpop.permute.xlu0 %1781
          %1783 = vrot.lane.b32.xlu0 %v1748, 64
          %v1784 = vpop.permute.xlu0 %1783
          %1785 = vrot.lane.b32.xlu0 %v1751, 64
          %v1786 = vpop.permute.xlu0 %1785
          %1787 = vrot.lane.b32.xlu0 %v1755, 64
          %v1788 = vpop.permute.xlu0 %1787
          %1789 = vrot.lane.b32.xlu0 %v1758, 64
          %v1790 = vpop.permute.xlu0 %1789
          %vm1807 = vcmask 585216
          %1808 = vst.msk [vmem:[#allocation2] sm:$0xf] %vm1807, %v1760
          %1809 = vst.msk [vmem:[#allocation2 + $0x4] sm:$0xf] %vm1807, %v1762
          %1810 = vst.msk [vmem:[#allocation2 + $0x8] sm:$0xf] %vm1807, %v1764
          %1811 = vst.msk [vmem:[#allocation2 + $0xc] sm:$0xf] %vm1807, %v1766
          %1812 = vst.msk [vmem:[#allocation2 + $0x10] sm:$0xf] %vm1807, %v1768
          %1813 = vst.msk [vmem:[#allocation2 + $0x14] sm:$0xf] %vm1807, %v1770
          %1814 = vst.msk [vmem:[#allocation2 + $0x18] sm:$0xf] %vm1807, %v1772
          %1815 = vst.msk [vmem:[#allocation2 + $0x1c] sm:$0xf] %vm1807, %v1774
          %1816 = vst.msk [vmem:[#allocation2 + $0x20] sm:$0xf] %vm1807, %v1776
          %1817 = vst.msk [vmem:[#allocation2 + $0x24] sm:$0xf] %vm1807, %v1778
          %1818 = vst.msk [vmem:[#allocation2 + $0x28] sm:$0xf] %vm1807, %v1780
          %1819 = vst.msk [vmem:[#allocation2 + $0x2c] sm:$0xf] %vm1807, %v1782
          %1820 = vst.msk [vmem:[#allocation2 + $0x30] sm:$0xf] %vm1807, %v1784
          %1821 = vst.msk [vmem:[#allocation2 + $0x34] sm:$0xf] %vm1807, %v1786
          %1822 = vst.msk [vmem:[#allocation2 + $0x38] sm:$0xf] %vm1807, %v1788
          %1823 = vst.msk [vmem:[#allocation2 + $0x3c] sm:$0xf] %vm1807, %v1790
        $region36: #{tpu_custom_call.1} parent=31 // pred_fallthru
          _
        %v1824 = vld [vmem:[#allocation2] sm:$0xf]
        %v1825 = vld [vmem:[#allocation2 + $0x4] sm:$0xf]
        %v1826 = vld [vmem:[#allocation2 + $0x8] sm:$0xf]
        %v1827 = vld [vmem:[#allocation2 + $0xc] sm:$0xf]
        %v1828 = vld [vmem:[#allocation2 + $0x10] sm:$0xf]
        %v1829 = vld [vmem:[#allocation2 + $0x14] sm:$0xf]
        %v1830 = vld [vmem:[#allocation2 + $0x18] sm:$0xf]
        %v1831 = vld [vmem:[#allocation2 + $0x1c] sm:$0xf]
        %v1832 = vld [vmem:[#allocation2 + $0x20] sm:$0xf]
        %v1833 = vld [vmem:[#allocation2 + $0x24] sm:$0xf]
        %v1834 = vld [vmem:[#allocation2 + $0x28] sm:$0xf]
        %v1835 = vld [vmem:[#allocation2 + $0x2c] sm:$0xf]
        %v1836 = vld [vmem:[#allocation2 + $0x30] sm:$0xf]
        %v1837 = vld [vmem:[#allocation2 + $0x34] sm:$0xf]
        %v1838 = vld [vmem:[#allocation2 + $0x38] sm:$0xf]
        %v1839 = vld [vmem:[#allocation2 + $0x3c] sm:$0xf]
        %v1840 = vld [vmem:[%s219] sm:$0xf]
        %v1841 = vld [vmem:[%s219 + $0x4] sm:$0xf]
        %v1842 = vld [vmem:[%s219 + $0x8] sm:$0xf]
        %v1843 = vld [vmem:[%s219 + $0xc] sm:$0xf]
        %v1844 = vld [vmem:[%s219 + $0x10] sm:$0xf]
        %v1845 = vld [vmem:[%s219 + $0x14] sm:$0xf]
        %v1846 = vld [vmem:[%s219 + $0x18] sm:$0xf]
        %v1847 = vld [vmem:[%s219 + $0x1c] sm:$0xf]
        %v1848 = vld [vmem:[%s219 + $0x20] sm:$0xf]
        %v1849 = vld [vmem:[%s222] sm:$0x1]
        %v1851 = vlaneseq
        %v1852 = vshrl.u32 %v1851, 7
        %v1853 = vsub.s32 0, %v1852
        %v1854 = vrot.slane %v1849, %v1853
        %v1872 = vunpack.c.l.b16 %v1824
        %v1873 = vunpack.c.l.b16 %v1825
        %v1874 = vunpack.c.l.b16 %v1826
        %v1875 = vunpack.c.l.b16 %v1827
        %v1876 = vunpack.c.l.b16 %v1828
        %v1877 = vunpack.c.l.b16 %v1829
        %v1878 = vunpack.c.l.b16 %v1830
        %v1879 = vunpack.c.l.b16 %v1831
        %v1880 = vunpack.c.l.b16 %v1832
        %v1881 = vunpack.c.l.b16 %v1833
        %v1882 = vunpack.c.l.b16 %v1834
        %v1883 = vunpack.c.l.b16 %v1835
        %v1884 = vunpack.c.l.b16 %v1836
        %v1885 = vunpack.c.l.b16 %v1837
        %v1886 = vunpack.c.l.b16 %v1838
        %v1887 = vunpack.c.l.b16 %v1839
        %v1888 = vpack.c.b16 %v1873, %v1872
        %v1889 = vpack.c.b16 %v1875, %v1874
        %v1890 = vpack.c.b16 %v1877, %v1876
        %v1891 = vpack.c.b16 %v1879, %v1878
        %v1892 = vpack.c.b16 %v1881, %v1880
        %v1893 = vpack.c.b16 %v1883, %v1882
        %v1894 = vpack.c.b16 %v1885, %v1884
        %v1895 = vpack.c.b16 %v1887, %v1886
        %v1905 = vunpack.c.l.b16 %v1840
        %v1906 = vunpack.c.l.b16 %v1841
        %v1907 = vunpack.c.l.b16 %v1842
        %v1908 = vunpack.c.l.b16 %v1843
        %v1909 = vunpack.c.l.b16 %v1844
        %v1910 = vunpack.c.l.b16 %v1845
        %v1911 = vunpack.c.l.b16 %v1846
        %v1912 = vunpack.c.l.b16 %v1847
        %v1913 = vunpack.c.l.b16 %v1848
        %v1914 = vpack.c.b16 %v1906, %v1905
        %v1915 = vpack.c.b16 %v1908, %v1907
        %v1916 = vpack.c.b16 %v1910, %v1909
        %v1917 = vpack.c.b16 %v1912, %v1911
        %v1918 = vpack.c.b16 %v1913, %v1913
        %vm1923 = vcmask 588800
        %v1925 = vsel %vm1923, %v1888, 0
        %v1928 = vsel %vm1923, %v1889, 0
        %v1931 = vsel %vm1923, %v1890, 0
        %v1934 = vsel %vm1923, %v1891, 0
        %v1937 = vsel %vm1923, %v1892, 0
        %v1940 = vsel %vm1923, %v1893, 0
        %v1943 = vsel %vm1923, %v1894, 0
        %v1946 = vsel %vm1923, %v1895, 0
        %vm1948 = vcmask 1043456
        %v1950 = vsel %vm1948, %v1918, 0
        %1952 = vmatprep.subr.bf16.mxu0 0
        %1953 = vmatpush1.bf16.msra.mxu0 0
        %1954 = vmatprep.subr.bf16.mxu0 0
        %1955 = vmatpush1.bf16.msra.mxu0 0
        %1956 = vmatprep.subr.bf16.mxu0 0
        %1957 = vmatpush1.bf16.msra.mxu0 0
        %1958 = vmatprep.subr.bf16.mxu0 0
        %1959 = vmatpush1.bf16.msra.mxu0 %v1950
        %1960 = vmatprep.subr.bf16.mxu0 0
        %1961 = vmatpush1.bf16.msra.mxu0 %v1917
        %1962 = vmatprep.subr.bf16.mxu0 0
        %1963 = vmatpush1.bf16.msra.mxu0 %v1916
        %1964 = vmatprep.subr.bf16.mxu0 0
        %1965 = vmatpush1.bf16.msra.mxu0 %v1915
        %1966 = vmatprep.subr.bf16.mxu0 0
        %1967 = vmatpush1.bf16.msra.mxu0 %v1914
        %1968 = vmatprep.subr.bf16.mxu0 0
        %1969 = vmatpush2.bf16.msra.mxu0 0
        %1970 = vmatprep.subr.bf16.mxu0 0
        %1971 = vmatpush2.bf16.msra.mxu0 0
        %1972 = vmatprep.subr.bf16.mxu0 0
        %1973 = vmatpush2.bf16.msra.mxu0 0
        %1974 = vmatprep.subr.bf16.mxu0 0
        %1975 = vmatpush2.bf16.msra.mxu0 0
        %1976 = vmatprep.subr.bf16.mxu0 0
        %1977 = vmatpush2.bf16.msra.mxu0 0
        %1978 = vmatprep.subr.bf16.mxu0 0
        %1979 = vmatpush2.bf16.msra.mxu0 0
        %1980 = vmatprep.subr.bf16.mxu0 0
        %1981 = vmatpush2.bf16.msra.mxu0 0
        %1982 = vmatprep.subr.bf16.mxu0 0
        %1983 = vmatpush2.bf16.msra.mxu0 0
        %1984 = vmatprep.mubr.bf16.mxu0 0
        %1985 = vmatmul.mubr.bf16.gmra.mxu0 %v1925
        %v1986 = vpop.f32.mrf.mxu0
        %v1987 = vadd.f32 %v1854, %v1986
        %v1988 = vpop.f32.mrf.mxu0
        %v1989 = vpop.f32.mrf.mxu0
        %v1990 = vadd.f32 %v1854, %v1989
        %v1991 = vpop.f32.mrf.mxu0
        %1992 = vmatprep.mubr.bf16.mxu0 0
        %1993 = vmatmul.mubr.bf16.gmra.mxu0 %v1928
        %v1994 = vpop.f32.mrf.mxu0
        %v1995 = vadd.f32 %v1854, %v1994
        %v1996 = vpop.f32.mrf.mxu0
        %v1997 = vpop.f32.mrf.mxu0
        %v1998 = vadd.f32 %v1854, %v1997
        %v1999 = vpop.f32.mrf.mxu0
        %2000 = vmatprep.mubr.bf16.mxu0 0
        %2001 = vmatmul.mubr.bf16.gmra.mxu0 %v1931
        %v2002 = vpop.f32.mrf.mxu0
        %v2003 = vadd.f32 %v1854, %v2002
        %v2004 = vpop.f32.mrf.mxu0
        %v2005 = vpop.f32.mrf.mxu0
        %v2006 = vadd.f32 %v1854, %v2005
        %v2007 = vpop.f32.mrf.mxu0
        %2008 = vmatprep.mubr.bf16.mxu0 0
        %2009 = vmatmul.mubr.bf16.gmra.mxu0 %v1934
        %v2010 = vpop.f32.mrf.mxu0
        %v2011 = vadd.f32 %v1854, %v2010
        %v2012 = vpop.f32.mrf.mxu0
        %v2013 = vpop.f32.mrf.mxu0
        %v2014 = vadd.f32 %v1854, %v2013
        %v2015 = vpop.f32.mrf.mxu0
        %2016 = vmatprep.mubr.bf16.mxu0 0
        %2017 = vmatmul.mubr.bf16.gmra.mxu0 %v1937
        %v2018 = vpop.f32.mrf.mxu0
        %v2019 = vadd.f32 %v1854, %v2018
        %v2020 = vpop.f32.mrf.mxu0
        %v2021 = vpop.f32.mrf.mxu0
        %v2022 = vadd.f32 %v1854, %v2021
        %v2023 = vpop.f32.mrf.mxu0
        %2024 = vmatprep.mubr.bf16.mxu0 0
        %2025 = vmatmul.mubr.bf16.gmra.mxu0 %v1940
        %v2026 = vpop.f32.mrf.mxu0
        %v2027 = vadd.f32 %v1854, %v2026
        %v2028 = vpop.f32.mrf.mxu0
        %v2029 = vpop.f32.mrf.mxu0
        %v2030 = vadd.f32 %v1854, %v2029
        %v2031 = vpop.f32.mrf.mxu0
        %2032 = vmatprep.mubr.bf16.mxu0 0
        %2033 = vmatmul.mubr.bf16.gmra.mxu0 %v1943
        %v2034 = vpop.f32.mrf.mxu0
        %v2035 = vadd.f32 %v1854, %v2034
        %v2036 = vpop.f32.mrf.mxu0
        %v2037 = vpop.f32.mrf.mxu0
        %v2038 = vadd.f32 %v1854, %v2037
        %v2039 = vpop.f32.mrf.mxu0
        %2040 = vmatprep.mubr.bf16.mxu0 0
        %2041 = vmatmul.mubr.bf16.gmra.mxu0 %v1946
        %v2042 = vpop.f32.mrf.mxu0
        %v2043 = vadd.f32 %v1854, %v2042
        %v2044 = vpop.f32.mrf.mxu0
        %v2045 = vpop.f32.mrf.mxu0
        %v2046 = vadd.f32 %v1854, %v2045
        %v2047 = vpop.f32.mrf.mxu0
        %2048 = vdwg.mxu0
        %2049 = vst [vmem:[%s210] sm:$0xff] %v1987
        %2050 = vst [vmem:[%s210 + $0x8] sm:$0xff] %v1990
        %2051 = vst [vmem:[%s210 + $0x10] sm:$0xff] %v1995
        %2052 = vst [vmem:[%s210 + $0x18] sm:$0xff] %v1998
        %2053 = vst [vmem:[%s210 + $0x20] sm:$0xff] %v2003
        %2054 = vst [vmem:[%s210 + $0x28] sm:$0xff] %v2006
        %2055 = vst [vmem:[%s210 + $0x30] sm:$0xff] %v2011
        %2056 = vst [vmem:[%s210 + $0x38] sm:$0xff] %v2014
        %2057 = vst [vmem:[%s210 + $0x40] sm:$0xff] %v2019
        %2058 = vst [vmem:[%s210 + $0x48] sm:$0xff] %v2022
        %2059 = vst [vmem:[%s210 + $0x50] sm:$0xff] %v2027
        %2060 = vst [vmem:[%s210 + $0x58] sm:$0xff] %v2030
        %2061 = vst [vmem:[%s210 + $0x60] sm:$0xff] %v2035
        %2062 = vst [vmem:[%s210 + $0x68] sm:$0xff] %v2038
        %2063 = vst [vmem:[%s210 + $0x70] sm:$0xff] %v2043
        %2064 = vst [vmem:[%s210 + $0x78] sm:$0xff] %v2046
        %s2065 = sand.u32 %s126, 1
        %s2066 = scalar_lea.sflag [#allocation4], %s2065
        %s2067 = sand.u32 %s126, 1
        %s2068 = smul.addr %s2067, 128
        %s2069 = scalar_lea.vmem [#allocation3], %s2068
        // Predicated region
        $region37: #{tpu_custom_call.1} parent=31 // pred_check
          %p2070 = pneg %p136
        $region38: #{tpu_custom_call.1} parent=31 // pred_check_branch
          %2072 = sbr.rel (%p2070) target = $region40
        $region39: #{tpu_custom_call.1} parent=31 // pred_region
          %s2073 = smul.u32 8, %s23
          %s2075 = ssub.s32 2048, 2048
          %2076 = vsyncadd %s2066, %s2075
          %s2077 = smul.addr %s2073, 2
          %s2078 = sadd.s32 %s24, %s2077
          %s2079 = smul.addr %s22, 32
          %s2080 = sadd.s32 %s2078, %s2079
          %s2081 = smul.addr %s2080, 128
          %s2082 = scalar_lea.hbm %s3, %s2081
          %s2083 = sshll.u32 %s2069, 4
          %s2084 = int_to_ptr.vmem [resolvable:$true] %s2083
          %2089 = dma.vmem_to_hbm [thread:$0]  %s2084, 2048, %s2082, %s2066, 128, 128, 8
        $region40: #{tpu_custom_call.1} parent=31 // pred_fallthru
          _
      $region32: #{tpu_custom_call.1} parent=5 // pred_fallthru
        _
      %p2090 = scmp.le.s32.totalorder 2, %s12
      // Predicated region
      $region41: #{tpu_custom_call.1} parent=5 // pred_check
        %p2091 = pneg %p2090
      $region42: #{tpu_custom_call.1} parent=5 // pred_check_branch
        %2093 = sbr.rel (%p2091) target = $region44
      $region43: #{tpu_custom_call.1} parent=5 // pred_region
        %s2094 = ssub.s32 %s12, 2
        // Predicated region
        $region45: #{tpu_custom_call.1} parent=43 // pred_check
          %p2095 = pneg %p142
        $region46: #{tpu_custom_call.1} parent=43 // pred_check_branch
          %2097 = sbr.rel (%p2095) target = $region48
        $region47: #{tpu_custom_call.1} parent=43 // pred_region
          %s2098 = sand.u32 %s127, 1
          %s2099 = scalar_lea.sflag [#allocation4], %s2098
          %s2100 = sand.u32 %s127, 1
          %s2101 = smul.addr %s2100, 128
          %s2102 = scalar_lea.vmem [#allocation3], %s2101
          %2103 = dma.done %s2099, 2048
        $region48: #{tpu_custom_call.1} parent=43 // pred_fallthru
          _
      $region44: #{tpu_custom_call.1} parent=5 // pred_fallthru
        _
    $region6: #{tpu_custom_call.1} parent=1 // loop_footer
      %s16 = sadd.s32 1, %s12
    $region7: #{tpu_custom_call.1} parent=1 // loop_footer_branch
      %11 = sbr.rel target = $region3
    $region8: #{tpu_custom_call.1} parent=1 // loop_exit
      _
    %2104 = vsyncpa [#allocation4], 1
    %s2105 = scalar_lea.sflag [#allocation4], 1
    %2106 = vsyncpa %s2105, 1

</llo_original>
